<compile_context>
chip_gen: v7x
topology: tpu7x:2x2x1
jax: 0.10.0
libtpu: 0.0.40
codegen_flags: <defaults>
</compile_context>

<pallas_src>
import functools

import jax
import jax.numpy as jnp
from jax.experimental import pallas as pl
from jax.experimental.pallas import tpu as pltpu


def sae_forward_kernel(x_ref, enc_w_ref, enc_b_ref, dec_w_ref, dec_b_ref,
                       out_ref, e_pre_ref, mean_ref, std_ref, xstd_ref,
                       acc_ref, xsh_ref):
    e_idx = pl.program_id(1)
    n_e = pl.num_programs(1)

    # ---- once per batch tile: standardize + init accumulator -------------------------
    @pl.when(e_idx == 0)
    def _standardize_and_init():
        x = x_ref[...].astype(jnp.float32)      # native-dtype DMA, f32 math in-kernel
        d = x.shape[-1]
        mean = jnp.mean(x, axis=-1, keepdims=True)
        xc = x - mean
        # torch.std -> unbiased (ddof=1); epsilon added to std (not var), matching the module.
        var = jnp.sum(xc * xc, axis=-1, keepdims=True) * (1.0 / (d - 1))
        std = jnp.sqrt(var) + 1e-7
        inv_std = 1.0 / std                      # exact; (tile_b, 1) divide, once per b-tile
        xs = xc * inv_std

        # (tile_b, 1) stores are masked/partial-lane but happen only once per batch tile,
        # so they stay off the hot vst path of the big out/e_pre stores.
        mean_ref[...] = mean
        std_ref[...] = std
        xstd_ref[...] = xs.astype(xstd_ref.dtype)
        # Hoist decoder-bias shift + matmul-dtype cast out of the E reduction loop.
        xsh_ref[...] = (xs - dec_b_ref[...]).astype(xsh_ref.dtype)
        acc_ref[...] = jnp.zeros_like(acc_ref)

    # ---- encode this E tile: e_pre = relu((xs - dec_b) @ enc_w[:, tile] + enc_b[tile]) ----
    e_pre = jnp.dot(xsh_ref[...], enc_w_ref[...],
                    preferred_element_type=jnp.float32) + enc_b_ref[...]
    e_pre = jnp.maximum(e_pre, 0.0)
    e_pre_c = e_pre.astype(dec_w_ref.dtype)      # single cast: store + decode-matmul LHS
    if e_pre_ref.dtype == dec_w_ref.dtype:
        e_pre_ref[...] = e_pre_c
    else:
        e_pre_ref[...] = e_pre.astype(e_pre_ref.dtype)

    # TODO(synk): post_process_embedding is abstract in the base class; identity assumed,
    # and cfg['normalize'] defaults to False, so e == e_pre (wrapper aliases them).

    # ---- decode partial sum over this E tile ------------------------------------------
    acc_ref[...] += jnp.dot(e_pre_c, dec_w_ref[...], preferred_element_type=jnp.float32)

    # ---- finalize on the last E step: +decoder_b, destandardize, write out ------------
    @pl.when(e_idx == n_e - 1)
    def _finalize():
        rec = acc_ref[...] + dec_b_ref[...]
        out_ref[...] = (mean_ref[...] + rec * std_ref[...]).astype(out_ref.dtype)


def _device_defaults():
    """Generation-dispatched tile sizes, VMEM budget and resident-block buffering."""
    try:
        kind = jax.devices()[0].device_kind.lower()
    except Exception:
        kind = ""
    if "v7" in kind:
        # v7x: 64 MiB physical VMEM / TC -> cap below it, single-buffer b-resident blocks
        # so tile_b=256 fits.
        return dict(tile_b=256, tile_e=512,
                    vmem_limit_bytes=56 * 1024 * 1024, single_buffer_resident=True)
    if "v5" in kind or "v6" in kind:
        # 128 MiB VMEM: big batch tiles to push past the streamed-weight DMA roofline.
        return dict(tile_b=512, tile_e=1024,
                    vmem_limit_bytes=100 * 1024 * 1024, single_buffer_resident=False)
    # Unknown generation: conservative.
    return dict(tile_b=256, tile_e=512,
                vmem_limit_bytes=48 * 1024 * 1024, single_buffer_resident=False)


@functools.partial(
    jax.jit,
    static_argnames=("tile_b", "tile_e", "compute_dtype", "e_dtype",
                     "single_buffer_resident", "vmem_limit_bytes"))
def _sae_forward(x, encoder_w, encoder_b, decoder_w, decoder_b, *,
                 tile_b, tile_e, compute_dtype, e_dtype,
                 single_buffer_resident, vmem_limit_bytes):
    B, D = x.shape
    E = encoder_w.shape[1]
    tile_b = min(tile_b, B)
    tile_e = min(tile_e, E)
    # TODO(synk): no remainder handling -- callers must pad B/E to tile multiples.
    assert B % tile_b == 0, (B, tile_b)
    assert E % tile_e == 0, (E, tile_e)
    assert tile_b == B or tile_b % 8 == 0, tile_b
    assert tile_e == E or tile_e % 128 == 0, tile_e
    n_b, n_e = B // tile_b, E // tile_e

    # bf16 weights: MXU-native and half the streamed DMA bytes (re-streamed per batch tile).
    enc_w = encoder_w.astype(compute_dtype)
    dec_w = decoder_w.astype(compute_dtype)
    enc_b = encoder_b.reshape(1, E).astype(jnp.float32)
    dec_b = decoder_b.reshape(1, D).astype(jnp.float32)

    def resident(block_shape, index_map):
        # Blocks whose index only changes on the b axis: single-buffer them on v7x to
        # reclaim VMEM (they change once every n_e steps, so the bubble is amortized).
        if single_buffer_resident:
            return pl.BlockSpec(block_shape, index_map, pipeline_mode=pl.Buffered(1))
        return pl.BlockSpec(block_shape, index_map)

    grid_spec = pltpu.PrefetchScalarGridSpec(
        num_scalar_prefetch=0,
        grid=(n_b, n_e),
        in_specs=[
            resident((tile_b, D), lambda b, e: (b, 0)),          # x: resident across E
            pl.BlockSpec((D, tile_e), lambda b, e: (0, e)),      # encoder_w tile (streamed)
            pl.BlockSpec((1, tile_e), lambda b, e: (0, e)),      # encoder_b tile
            pl.BlockSpec((tile_e, D), lambda b, e: (e, 0)),      # decoder_w tile (streamed)
            resident((1, D),          lambda b, e: (0, 0)),      # decoder_b (resident)
        ],
        out_specs=[
            resident((tile_b, D), lambda b, e: (b, 0)),              # out (accumulated)
            pl.BlockSpec((tile_b, tile_e), lambda b, e: (b, e)),     # e_pre (streamed, bf16)
            resident((tile_b, 1), lambda b, e: (b, 0)),              # x_mean
            resident((tile_b, 1), lambda b, e: (b, 0)),              # x_std
            resident((tile_b, D), lambda b, e: (b, 0)),              # standardized_x
        ],
        scratch_shapes=[
            pltpu.VMEM((tile_b, D), jnp.float32),     # decode accumulator
            pltpu.VMEM((tile_b, D), compute_dtype),   # (xs - decoder_b) in matmul dtype
        ],
    )

    out_dtype = x.dtype
    out_shapes = (
        jax.ShapeDtypeStruct((B, D), out_dtype),     # out
        jax.ShapeDtypeStruct((B, E), e_dtype),       # e_pre (e aliases this)
        jax.ShapeDtypeStruct((B, 1), jnp.float32),   # x_mean
        jax.ShapeDtypeStruct((B, 1), jnp.float32),   # x_std
        jax.ShapeDtypeStruct((B, D), out_dtype),     # standardized_x
    )

    out, e_pre, x_mean, x_std, x_standardized = pl.pallas_call(
        sae_forward_kernel,
        out_shape=out_shapes,
        grid_spec=grid_spec,
        compiler_params=pltpu.CompilerParams(
            dimension_semantics=("parallel", "arbitrary"),
            vmem_limit_bytes=vmem_limit_bytes,
        ),
    )(x, enc_w, enc_b, dec_w, dec_b)

    # post_process_embedding is identity and cfg['normalize'] is False by default,
    # so e == e_pre; alias instead of writing the (B, E) tensor twice.
    e = e_pre
    return out, e, e_pre, x_mean, x_std, x_standardized


def sae_forward(x, encoder_w, encoder_b, decoder_w, decoder_b, *,
                tile_b=None, tile_e=None, compute_dtype=jnp.bfloat16,
                e_dtype=jnp.bfloat16, single_buffer_resident=None,
                vmem_limit_bytes=None):
    defaults = _device_defaults()
    tile_b = defaults["tile_b"] if tile_b is None else tile_b
    tile_e = defaults["tile_e"] if tile_e is None else tile_e
    vmem_limit_bytes = (defaults["vmem_limit_bytes"]
                        if vmem_limit_bytes is None else vmem_limit_bytes)
    single_buffer_resident = (defaults["single_buffer_resident"]
                              if single_buffer_resident is None else single_buffer_resident)
    return _sae_forward(x, encoder_w, encoder_b, decoder_w, decoder_b,
                        tile_b=tile_b, tile_e=tile_e,
                        compute_dtype=compute_dtype, e_dtype=e_dtype,
                        single_buffer_resident=single_buffer_resident,
                        vmem_limit_bytes=vmem_limit_bytes)


def init_params(key, input_dim, embedding_dim):
    # kaiming_uniform_ on [input_dim, embedding_dim]: fan_in = embedding_dim,
    # gain = sqrt(2) (leaky_relu, a=0), bound = sqrt(3) * gain / sqrt(fan_in) = sqrt(6/fan_in)
    bound = (6.0 / embedding_dim) ** 0.5
    encoder_w = jax.random.uniform(key, (input_dim, embedding_dim),
                                   jnp.float32, -bound, bound)
    encoder_b = jnp.zeros((embedding_dim,), jnp.float32)
    # decoder_w = encoder_w.T, then row-wise l2-normalized (normalize_decoder)
    decoder_w = encoder_w.T
    decoder_w = decoder_w / jnp.linalg.norm(decoder_w, axis=-1, keepdims=True)
    decoder_b = jnp.zeros((input_dim,), jnp.float32)
    return encoder_w, encoder_b, decoder_w, decoder_b


def reference_forward(x, encoder_w, encoder_b, decoder_w, decoder_b):
    # Pure f32 reference mirroring the PyTorch module's forward().
    mean = jnp.mean(x, axis=-1, keepdims=True)
    xc = x - mean
    std = jnp.std(x, axis=-1, keepdims=True, ddof=1) + 1e-7
    xs = xc / std
    e_pre = jax.nn.relu((xs - decoder_b) @ encoder_w + encoder_b)
    e = e_pre
    out = mean + (e @ decoder_w + decoder_b) * std
    return out, e, e_pre, mean, std, xs


if __name__ == "__main__":
    B, input_dim, embedding_dim = 256, 128, 512
    key = jax.random.PRNGKey(0)
    k_w, k_x = jax.random.split(key)

    encoder_w, encoder_b, decoder_w, decoder_b = init_params(k_w, input_dim, embedding_dim)
    x = jax.random.normal(k_x, (B, input_dim), jnp.float32)

    # tile_e < E and tile_b < B so the E-axis accumulation and multi-batch-tile paths are
    # exercised (grid = (2, 2)); production defaults come from _device_defaults().
    outs = sae_forward(x, encoder_w, encoder_b, decoder_w, decoder_b,
                       tile_b=128, tile_e=256)
    outs = jax.block_until_ready(outs)

    refs = reference_forward(x, encoder_w, encoder_b, decoder_w, decoder_b)
    names = ("out", "e", "e_pre", "x_mean", "x_std", "standardized_x")
    # bf16 matmuls + bf16 e_pre output -> looser tolerance on matmul-derived outputs;
    # standardization stats are pure f32 with exact reciprocal and stay tight.
    tols = {"out": 5e-2, "e": 5e-2, "e_pre": 5e-2,
            "x_mean": 1e-5, "x_std": 1e-5, "standardized_x": 1e-4}
    for name, got, want in zip(names, outs, refs):
        assert got.shape == want.shape, (name, got.shape, want.shape)
        tol = tols[name]
        assert jnp.allclose(got.astype(jnp.float32), want, atol=tol, rtol=tol), \
            f"mismatch vs reference: {name}"

    print("KERNEL_OK")
</pallas_src>

<mosaic_0001>
module attributes {stable_mosaic.version = 11 : i64} {
  func.func @sae_forward_kernel(%arg0: i32, %arg1: i32, %arg2: memref<128x128xf32, #tpu.memory_space<vmem>>, %arg3: memref<128x256xbf16, #tpu.memory_space<vmem>>, %arg4: memref<1x256xf32, #tpu.memory_space<vmem>>, %arg5: memref<256x128xbf16, #tpu.memory_space<vmem>>, %arg6: memref<1x128xf32, #tpu.memory_space<vmem>>, %arg7: memref<128x128xf32, #tpu.memory_space<vmem>>, %arg8: memref<128x256xbf16, #tpu.memory_space<vmem>>, %arg9: memref<128x1xf32, #tpu.memory_space<vmem>>, %arg10: memref<128x1xf32, #tpu.memory_space<vmem>>, %arg11: memref<128x128xf32, #tpu.memory_space<vmem>>, %arg12: memref<128x128xf32, #tpu.memory_space<vmem>>, %arg13: memref<128x128xbf16, #tpu.memory_space<vmem>>) attributes {dimension_semantics = [#tpu.dimension_semantics<parallel>, #tpu.dimension_semantics<arbitrary>], iteration_bounds = array<i64: 2, 2>, scalar_prefetch = 0 : i64, scratch_operands = 2 : i64, tpu.core_type = #tpu.core_type<tc>, window_params = [{transform_indices = @transform_0, window_bounds = array<i64: 128, 128>}, {transform_indices = @transform_1, window_bounds = array<i64: 128, 256>}, {transform_indices = @transform_2, window_bounds = array<i64: 1, 256>}, {transform_indices = @transform_3, window_bounds = array<i64: 256, 128>}, {pipeline_mode = #tpu.pipeline_mode<synchronous>, transform_indices = @transform_4, window_bounds = array<i64: 1, 128>}, {transform_indices = @transform_5, window_bounds = array<i64: 128, 128>}, {transform_indices = @transform_6, window_bounds = array<i64: 128, 256>}, {transform_indices = @transform_7, window_bounds = array<i64: 128, 1>}, {transform_indices = @transform_8, window_bounds = array<i64: 128, 1>}, {transform_indices = @transform_9, window_bounds = array<i64: 128, 128>}]} {
    %c0_i32 = arith.constant 0 : i32
    %0 = arith.cmpi eq, %arg1, %c0_i32 : i32
    %1 = arith.extui %0 : i1 to i32
    %c0_i32_0 = arith.constant 0 : i32
    %2 = arith.cmpi ne, %1, %c0_i32_0 : i32
    scf.if %2 {
      %c0_17 = arith.constant 0 : index
      %c0_18 = arith.constant 0 : index
      %21 = vector.load %arg2[%c0_17, %c0_18] : memref<128x128xf32, #tpu.memory_space<vmem>>, vector<128x128xf32>
      %cst_19 = arith.constant dense<0.000000e+00> : vector<128xf32>
      %22 = vector.multi_reduction <add>, %21, %cst_19 [1] : vector<128x128xf32> to vector<128xf32>
      %23 = vector.shape_cast %22 : vector<128xf32> to vector<128x1xf32>
      %cst_20 = arith.constant 1.280000e+02 : f32
      %24 = vector.broadcast %cst_20 : f32 to vector<128x1xf32>
      %25 = arith.divf %23, %24 : vector<128x1xf32>
      %26 = vector.broadcast %25 : vector<128x1xf32> to vector<128x128xf32>
      %27 = arith.subf %21, %26 : vector<128x128xf32>
      %28 = arith.mulf %27, %27 : vector<128x128xf32>
      %cst_21 = arith.constant dense<0.000000e+00> : vector<128xf32>
      %29 = vector.multi_reduction <add>, %28, %cst_21 [1] : vector<128x128xf32> to vector<128xf32>
      %30 = vector.shape_cast %29 : vector<128xf32> to vector<128x1xf32>
      %cst_22 = arith.constant 0.00787401571 : f32
      %31 = vector.broadcast %cst_22 : f32 to vector<128x1xf32>
      %32 = arith.mulf %30, %31 : vector<128x1xf32>
      %33 = math.sqrt %32 : vector<128x1xf32>
      %cst_23 = arith.constant 1.000000e-07 : f32
      %34 = vector.broadcast %cst_23 : f32 to vector<128x1xf32>
      %35 = arith.addf %33, %34 : vector<128x1xf32>
      %cst_24 = arith.constant 1.000000e+00 : f32
      %36 = vector.broadcast %cst_24 : f32 to vector<128x1xf32>
      %37 = arith.divf %36, %35 : vector<128x1xf32>
      %38 = vector.broadcast %37 : vector<128x1xf32> to vector<128x128xf32>
      %39 = arith.mulf %27, %38 : vector<128x128xf32>
      %c0_25 = arith.constant 0 : index
      %c0_26 = arith.constant 0 : index
      %40 = vector.load %arg9[%c0_25, %c0_26] : memref<128x1xf32, #tpu.memory_space<vmem>>, vector<128x1xf32>
      tpu.vector_store %arg9[%c0_25, %c0_26], %25 {strides = array<i32>} : memref<128x1xf32, #tpu.memory_space<vmem>>, vector<128x1xf32>,
      %c0_27 = arith.constant 0 : index
      %c0_28 = arith.constant 0 : index
      %41 = vector.load %arg10[%c0_27, %c0_28] : memref<128x1xf32, #tpu.memory_space<vmem>>, vector<128x1xf32>
      tpu.vector_store %arg10[%c0_27, %c0_28], %35 {strides = array<i32>} : memref<128x1xf32, #tpu.memory_space<vmem>>, vector<128x1xf32>,
      %c0_29 = arith.constant 0 : index
      %c0_30 = arith.constant 0 : index
      %42 = vector.load %arg11[%c0_29, %c0_30] : memref<128x128xf32, #tpu.memory_space<vmem>>, vector<128x128xf32>
      tpu.vector_store %arg11[%c0_29, %c0_30], %39 {strides = array<i32>} : memref<128x128xf32, #tpu.memory_space<vmem>>, vector<128x128xf32>,
      %c0_31 = arith.constant 0 : index
      %c0_32 = arith.constant 0 : index
      %43 = vector.load %arg6[%c0_31, %c0_32] : memref<1x128xf32, #tpu.memory_space<vmem>>, vector<1x128xf32>
      %44 = vector.broadcast %43 : vector<1x128xf32> to vector<128x128xf32>
      %45 = arith.subf %39, %44 : vector<128x128xf32>
      %46 = arith.truncf %45 : vector<128x128xf32> to vector<128x128xbf16>
      %c0_33 = arith.constant 0 : index
      %c0_34 = arith.constant 0 : index
      %47 = vector.load %arg13[%c0_33, %c0_34] : memref<128x128xbf16, #tpu.memory_space<vmem>>, vector<128x128xbf16>
      tpu.vector_store %arg13[%c0_33, %c0_34], %46 {strides = array<i32>} : memref<128x128xbf16, #tpu.memory_space<vmem>>, vector<128x128xbf16>,
      %cst_35 = arith.constant 0.000000e+00 : f32
      %48 = vector.broadcast %cst_35 : f32 to vector<128x128xf32>
      %c0_36 = arith.constant 0 : index
      %c0_37 = arith.constant 0 : index
      %49 = vector.load %arg12[%c0_36, %c0_37] : memref<128x128xf32, #tpu.memory_space<vmem>>, vector<128x128xf32>
      tpu.vector_store %arg12[%c0_36, %c0_37], %48 {strides = array<i32>} : memref<128x128xf32, #tpu.memory_space<vmem>>, vector<128x128xf32>,
    } else {
    }
    %c0 = arith.constant 0 : index
    %c0_1 = arith.constant 0 : index
    %3 = vector.load %arg13[%c0, %c0_1] : memref<128x128xbf16, #tpu.memory_space<vmem>>, vector<128x128xbf16>
    %c0_2 = arith.constant 0 : index
    %c0_3 = arith.constant 0 : index
    %4 = vector.load %arg3[%c0_2, %c0_3] : memref<128x256xbf16, #tpu.memory_space<vmem>>, vector<128x256xbf16>
    %cst = arith.constant dense<0.000000e+00> : vector<128x256xf32>
    %5 = tpu.matmul %3, %4, %cst {dimension_numbers = #tpu.dot_dimension_numbers<[1], [0], [0], [1], [0, 0, 1, 1], [], []>} : vector<128x128xbf16>, vector<128x256xbf16>, vector<128x256xf32> -> vector<128x256xf32>
    %c0_4 = arith.constant 0 : index
    %c0_5 = arith.constant 0 : index
    %6 = vector.load %arg4[%c0_4, %c0_5] : memref<1x256xf32, #tpu.memory_space<vmem>>, vector<1x256xf32>
    %7 = vector.broadcast %6 : vector<1x256xf32> to vector<128x256xf32>
    %8 = arith.addf %5, %7 : vector<128x256xf32>
    %cst_6 = arith.constant 0.000000e+00 : f32
    %9 = vector.broadcast %cst_6 : f32 to vector<128x256xf32>
    %10 = arith.maximumf %8, %9 : vector<128x256xf32>
    %11 = arith.truncf %10 : vector<128x256xf32> to vector<128x256xbf16>
    %c0_7 = arith.constant 0 : index
    %c0_8 = arith.constant 0 : index
    %12 = vector.load %arg8[%c0_7, %c0_8] : memref<128x256xbf16, #tpu.memory_space<vmem>>, vector<128x256xbf16>
    tpu.vector_store %arg8[%c0_7, %c0_8], %11 {strides = array<i32>} : memref<128x256xbf16, #tpu.memory_space<vmem>>, vector<128x256xbf16>,
    %c0_9 = arith.constant 0 : index
    %c0_10 = arith.constant 0 : index
    %13 = vector.load %arg12[%c0_9, %c0_10] : memref<128x128xf32, #tpu.memory_space<vmem>>, vector<128x128xf32>
    %c0_11 = arith.constant 0 : index
    %c0_12 = arith.constant 0 : index
    %14 = vector.load %arg5[%c0_11, %c0_12] : memref<256x128xbf16, #tpu.memory_space<vmem>>, vector<256x128xbf16>
    %cst_13 = arith.constant dense<0.000000e+00> : vector<128x128xf32>
    %15 = tpu.matmul %11, %14, %cst_13 {dimension_numbers = #tpu.dot_dimension_numbers<[1], [0], [0], [1], [0, 0, 1, 1], [], []>} : vector<128x256xbf16>, vector<256x128xbf16>, vector<128x128xf32> -> vector<128x128xf32>
    %16 = arith.addf %13, %15 : vector<128x128xf32>
    %c0_14 = arith.constant 0 : index
    %c0_15 = arith.constant 0 : index
    %17 = vector.load %arg12[%c0_14, %c0_15] : memref<128x128xf32, #tpu.memory_space<vmem>>, vector<128x128xf32>
    tpu.vector_store %arg12[%c0_14, %c0_15], %16 {strides = array<i32>} : memref<128x128xf32, #tpu.memory_space<vmem>>, vector<128x128xf32>,
    %c1_i32 = arith.constant 1 : i32
    %18 = arith.cmpi eq, %arg1, %c1_i32 : i32
    %19 = arith.extui %18 : i1 to i32
    %c0_i32_16 = arith.constant 0 : i32
    %20 = arith.cmpi ne, %19, %c0_i32_16 : i32
    scf.if %20 {
      %c0_17 = arith.constant 0 : index
      %c0_18 = arith.constant 0 : index
      %21 = vector.load %arg12[%c0_17, %c0_18] : memref<128x128xf32, #tpu.memory_space<vmem>>, vector<128x128xf32>
      %c0_19 = arith.constant 0 : index
      %c0_20 = arith.constant 0 : index
      %22 = vector.load %arg6[%c0_19, %c0_20] : memref<1x128xf32, #tpu.memory_space<vmem>>, vector<1x128xf32>
      %23 = vector.broadcast %22 : vector<1x128xf32> to vector<128x128xf32>
      %24 = arith.addf %21, %23 : vector<128x128xf32>
      %c0_21 = arith.constant 0 : index
      %c0_22 = arith.constant 0 : index
      %25 = vector.load %arg9[%c0_21, %c0_22] : memref<128x1xf32, #tpu.memory_space<vmem>>, vector<128x1xf32>
      %c0_23 = arith.constant 0 : index
      %c0_24 = arith.constant 0 : index
      %26 = vector.load %arg10[%c0_23, %c0_24] : memref<128x1xf32, #tpu.memory_space<vmem>>, vector<128x1xf32>
      %27 = vector.broadcast %26 : vector<128x1xf32> to vector<128x128xf32>
      %28 = arith.mulf %24, %27 : vector<128x128xf32>
      %29 = vector.broadcast %25 : vector<128x1xf32> to vector<128x128xf32>
      %30 = arith.addf %29, %28 : vector<128x128xf32>
      %c0_25 = arith.constant 0 : index
      %c0_26 = arith.constant 0 : index
      %31 = vector.load %arg7[%c0_25, %c0_26] : memref<128x128xf32, #tpu.memory_space<vmem>>, vector<128x128xf32>
      tpu.vector_store %arg7[%c0_25, %c0_26], %30 {strides = array<i32>} : memref<128x128xf32, #tpu.memory_space<vmem>>, vector<128x128xf32>,
    } else {
    }
    return
  }
  func.func @transform_0(%arg0: i32, %arg1: i32) -> (i32, i32) {
    %c0_i32 = arith.constant 0 : i32
    %c0_i32_0 = arith.constant 0 : i32
    return %arg0, %c0_i32 : i32, i32
  }
  func.func @transform_1(%arg0: i32, %arg1: i32) -> (i32, i32) {
    %c0_i32 = arith.constant 0 : i32
    %c0_i32_0 = arith.constant 0 : i32
    return %c0_i32, %arg1 : i32, i32
  }
  func.func @transform_2(%arg0: i32, %arg1: i32) -> (i32, i32) {
    %c0_i32 = arith.constant 0 : i32
    %c0_i32_0 = arith.constant 0 : i32
    return %c0_i32, %arg1 : i32, i32
  }
  func.func @transform_3(%arg0: i32, %arg1: i32) -> (i32, i32) {
    %c0_i32 = arith.constant 0 : i32
    %c0_i32_0 = arith.constant 0 : i32
    return %arg1, %c0_i32 : i32, i32
  }
  func.func @transform_4(%arg0: i32, %arg1: i32) -> (i32, i32) {
    %c0_i32 = arith.constant 0 : i32
    %c0_i32_0 = arith.constant 0 : i32
    %c0_i32_1 = arith.constant 0 : i32
    return %c0_i32, %c0_i32_0 : i32, i32
  }
  func.func @transform_5(%arg0: i32, %arg1: i32) -> (i32, i32) {
    %c0_i32 = arith.constant 0 : i32
    %c0_i32_0 = arith.constant 0 : i32
    return %arg0, %c0_i32 : i32, i32
  }
  func.func @transform_6(%arg0: i32, %arg1: i32) -> (i32, i32) {
    %c0_i32 = arith.constant 0 : i32
    return %arg0, %arg1 : i32, i32
  }
  func.func @transform_7(%arg0: i32, %arg1: i32) -> (i32, i32) {
    %c0_i32 = arith.constant 0 : i32
    %c0_i32_0 = arith.constant 0 : i32
    return %arg0, %c0_i32 : i32, i32
  }
  func.func @transform_8(%arg0: i32, %arg1: i32) -> (i32, i32) {
    %c0_i32 = arith.constant 0 : i32
    %c0_i32_0 = arith.constant 0 : i32
    return %arg0, %c0_i32 : i32, i32
  }
  func.func @transform_9(%arg0: i32, %arg1: i32) -> (i32, i32) {
    %c0_i32 = arith.constant 0 : i32
    %c0_i32_0 = arith.constant 0 : i32
    return %arg0, %c0_i32 : i32, i32
  }
}

</mosaic_0001>

<llo_original>
// kernel: _sae_forward.1
$region0: #{_sae_forward.1}
  #allocation0 [shape = 'u32[]', space=smem, size = 0x4, offset = 0x4, fixed_abs, tag = 'smem constant byte address 0x4 - core index']
  #allocation1 [shape = 'u32[144,128]{1,0:T(1,128)}', space=vmem, size = 0x12000, scoped, tag = 'internal scratch']
  #allocation2 [shape = 'f32[128,128]{1,0:T(8,128)}', space=vmem, size = 0x10000, scoped, tag = 'scratch operand']
  #allocation3 [shape = 'bf16[128,128]{1,0:T(16,128)(2,1)}', space=vmem, size = 0x8000, scoped, tag = 'scratch operand']
  %s0 = inlined_call_operand.vmem [shape: f32[256,128], index: 0, kind: input, shape index: {}]
  %s1 = inlined_call_operand.vmem [shape: bf16[128,512], index: 1, kind: input, shape index: {}]
  %s2 = inlined_call_operand.vmem [shape: f32[1,512], index: 2, kind: input, shape index: {}]
  %s3 = inlined_call_operand.vmem [shape: bf16[512,128], index: 3, kind: input, shape index: {}]
  %s4 = inlined_call_operand.vmem [shape: f32[1,128], index: 4, kind: input, shape index: {}]
  %s5 = inlined_call_operand.hbm [shape: f32[256,128], index: 5, kind: output, shape index: {0}]
  %s6 = inlined_call_operand.vmem [shape: bf16[256,512], index: 6, kind: output, shape index: {1}]
  %s7 = inlined_call_operand.vmem [shape: f32[256,1], index: 7, kind: output, shape index: {2}]
  %s8 = inlined_call_operand.vmem [shape: f32[256,1], index: 8, kind: output, shape index: {3}]
  %s9 = inlined_call_operand.hbm [shape: f32[256,128], index: 9, kind: output, shape index: {4}]
  %10 = xla_tuple %s5, %s6, %s7, %s8, %s9
  %s11 = sld [smem:[#allocation0]]
  $region165: #{_sae_forward.1} parent=0
    _
  %s13 = ssub.s32 1, %s11
  %s14 = scalar_select 0, %s13, %s11
  $region1: #{_sae_forward.1} parent=0
    #allocation4 [shape = 'u8[131072]{0}', space=vmem, size = 0x20000, scoped, tag = 'input window, operand 1']
    #allocation5 [shape = 'u8[131072]{0}', space=vmem, size = 0x20000, scoped, tag = 'output window, operand 0']
    #allocation6 [shape = 's32[2]{0}', space=sflag, size = 0x8, scoped, tag = 'scoped memory for _sae_forward.1']
    #allocation7 [shape = 'u8[131072]{0}', space=vmem, size = 0x20000, scoped, tag = 'output window, operand 1']
    #allocation8 [shape = 'u8[131072]{0}', space=vmem, size = 0x20000, scoped, tag = 'output window, operand 4']
    #allocation9 [shape = 's32[2]{0}', space=sflag, size = 0x8, scoped, tag = 'scoped memory for _sae_forward.1']
    %15 = vsyncpa [#allocation6], 0
    %s16 = scalar_lea.sflag [#allocation6], 1
    %17 = vsyncpa %s16, 0
    %18 = vsyncpa [#allocation9], 0
    %s19 = scalar_lea.sflag [#allocation9], 1
    %20 = vsyncpa %s19, 0
    loop: start=0, step=1, limit=6
    $region2: #{_sae_forward.1} parent=1 // loop_pre_header
      _
    $region3: #{_sae_forward.1} parent=1 // loop_header
      %s22 = sphi 0, %s26
      %p23 = scmp.ge.s32.totalorder %s22, 6
      %s29 = sphi 0, %s41
      %s30 = sphi 0, %s37
      %s31 = sphi 0, %s29
      %s32 = sphi 0, %s30
      %s33 = sphi 0, %s31
      %s34 = sphi 0, %s32
      %s44 = sphi 0, %s46
      %s47 = sphi 0, %s44
      %s48 = sphi 0, %s47
      %s64 = sphi 0, %s48
      %s70 = sphi 0, %s72
      %s73 = sphi 0, %s70
      %s74 = sphi 0, %s73
      %s90 = sphi 0, %s74
      %s96 = sphi 0, %s98
      %s99 = sphi 0, %s96
      %s100 = sphi 0, %s99
      %s116 = sphi 0, %s100
      %s122 = sphi 0, %s124
      %s125 = sphi 0, %s122
      %s126 = sphi 0, %s125
      %s142 = sphi 0, %s126
      %s146 = sphi 0, %s146
      %s148 = sphi 0, %s146
      %s149 = sphi 0, %s148
      %s163 = sphi 0, %s149
      %s169 = sphi 0, %s171
      %s172 = sphi 0, %s169
      %s173 = sphi 0, %s172
      %s189 = sphi 0, %s173
      %s197 = sphi 0, %s199
      %s200 = sphi 0, %s197
      %s201 = sphi 0, %s200
      %s217 = sphi 0, %s201
      %s223 = sphi 0, %s225
      %s226 = sphi 0, %s223
      %s227 = sphi 0, %s226
      %s243 = sphi 0, %s227
      %s249 = sphi 0, %s251
      %s252 = sphi 0, %s249
      %s253 = sphi 0, %s252
      %s269 = sphi 0, %s253
      %s275 = sphi 0, %s277
      %s278 = sphi 0, %s275
      %s279 = sphi 0, %s278
      %s295 = sphi 0, %s279
    $region4: #{_sae_forward.1} parent=1 // loop_header_branch
      %25 = sbr.rel (%p23) target = $region8
    $region5: #{_sae_forward.1} parent=1 // loop_body
      %s27 = ssub.s32 %s22, 1
      %s28 = ssub.s32 %s22, 2
      %s35 = sadd.s32 1, %s30
      %p36 = scmp.ge.s32.totalorder %s35, 2
      %s37 = scalar_select %p36, 0, %s35
      %s38 = sadd.s32 1, %s29
      %s39 = scalar_select %p36, %s38, %s29
      %p40 = scmp.ge.s32.totalorder %s39, 2
      %s41 = scalar_select %p40, 0, %s39
      %s42 = ssub.s32 %s29, %s41
      %p43 = scmp.eq.s32.totalorder %s42, 0
      %s45 = sadd.s32 %s44, 1
      %s46 = scalar_select %p43, %s44, %s45
      %p49 = pneg %p43
      %p50 = scmp.eq.s32.totalorder %s22, 3
      %p51 = por %p49, %p50
      %p52 = scmp.ne.s32.totalorder %s44, %s47
      %p53 = scmp.eq.s32.totalorder %s22, 0
      %p54 = por %p52, %p53
      %p55 = scmp.ne.s32.totalorder %s44, %s47
      %p56 = scmp.eq.s32.totalorder %s27, 3
      %p57 = por %p55, %p56
      %p58 = scmp.ne.s32.totalorder %s47, %s48
      %p59 = scmp.eq.s32.totalorder %s27, 0
      %p60 = por %p58, %p59
      %p61 = scmp.ne.s32.totalorder %s47, %s48
      %p62 = scmp.eq.s32.totalorder %s28, 3
      %p63 = por %p61, %p62
      %p65 = scmp.ne.s32.totalorder %s48, %s64
      %p66 = scmp.eq.s32.totalorder %s28, 0
      %p67 = por %p65, %p66
      %s68 = ssub.s32 %s30, %s37
      %p69 = scmp.eq.s32.totalorder %s68, 0
      %s71 = sadd.s32 %s70, 1
      %s72 = scalar_select %p69, %s70, %s71
      %p75 = pneg %p69
      %p76 = scmp.eq.s32.totalorder %s22, 3
      %p77 = por %p75, %p76
      %p78 = scmp.ne.s32.totalorder %s70, %s73
      %p79 = scmp.eq.s32.totalorder %s22, 0
      %p80 = por %p78, %p79
      %p81 = scmp.ne.s32.totalorder %s70, %s73
      %p82 = scmp.eq.s32.totalorder %s27, 3
      %p83 = por %p81, %p82
      %p84 = scmp.ne.s32.totalorder %s73, %s74
      %p85 = scmp.eq.s32.totalorder %s27, 0
      %p86 = por %p84, %p85
      %p87 = scmp.ne.s32.totalorder %s73, %s74
      %p88 = scmp.eq.s32.totalorder %s28, 3
      %p89 = por %p87, %p88
      %p91 = scmp.ne.s32.totalorder %s74, %s90
      %p92 = scmp.eq.s32.totalorder %s28, 0
      %p93 = por %p91, %p92
      %s94 = ssub.s32 %s30, %s37
      %p95 = scmp.eq.s32.totalorder %s94, 0
      %s97 = sadd.s32 %s96, 1
      %s98 = scalar_select %p95, %s96, %s97
      %p101 = pneg %p95
      %p102 = scmp.eq.s32.totalorder %s22, 3
      %p103 = por %p101, %p102
      %p104 = scmp.ne.s32.totalorder %s96, %s99
      %p105 = scmp.eq.s32.totalorder %s22, 0
      %p106 = por %p104, %p105
      %p107 = scmp.ne.s32.totalorder %s96, %s99
      %p108 = scmp.eq.s32.totalorder %s27, 3
      %p109 = por %p107, %p108
      %p110 = scmp.ne.s32.totalorder %s99, %s100
      %p111 = scmp.eq.s32.totalorder %s27, 0
      %p112 = por %p110, %p111
      %p113 = scmp.ne.s32.totalorder %s99, %s100
      %p114 = scmp.eq.s32.totalorder %s28, 3
      %p115 = por %p113, %p114
      %p117 = scmp.ne.s32.totalorder %s100, %s116
      %p118 = scmp.eq.s32.totalorder %s28, 0
      %p119 = por %p117, %p118
      %s120 = ssub.s32 %s30, %s37
      %p121 = scmp.eq.s32.totalorder %s120, 0
      %s123 = sadd.s32 %s122, 1
      %s124 = scalar_select %p121, %s122, %s123
      %p127 = pneg %p121
      %p128 = scmp.eq.s32.totalorder %s22, 3
      %p129 = por %p127, %p128
      %p130 = scmp.ne.s32.totalorder %s122, %s125
      %p131 = scmp.eq.s32.totalorder %s22, 0
      %p132 = por %p130, %p131
      %p133 = scmp.ne.s32.totalorder %s122, %s125
      %p134 = scmp.eq.s32.totalorder %s27, 3
      %p135 = por %p133, %p134
      %p136 = scmp.ne.s32.totalorder %s125, %s126
      %p137 = scmp.eq.s32.totalorder %s27, 0
      %p138 = por %p136, %p137
      %p139 = scmp.ne.s32.totalorder %s125, %s126
      %p140 = scmp.eq.s32.totalorder %s28, 3
      %p141 = por %p139, %p140
      %p143 = scmp.ne.s32.totalorder %s126, %s142
      %p144 = scmp.eq.s32.totalorder %s28, 0
      %p145 = por %p143, %p144
      %s147 = sadd.s32 %s146, 1
      %p150 = scmp.eq.s32.totalorder %s22, 3
      %p151 = scmp.ne.s32.totalorder %s146, %s148
      %p152 = scmp.eq.s32.totalorder %s22, 0
      %p153 = por %p151, %p152
      %p154 = scmp.ne.s32.totalorder %s146, %s148
      %p155 = scmp.eq.s32.totalorder %s27, 3
      %p156 = por %p154, %p155
      %p157 = scmp.ne.s32.totalorder %s148, %s149
      %p158 = scmp.eq.s32.totalorder %s27, 0
      %p159 = por %p157, %p158
      %p160 = scmp.ne.s32.totalorder %s148, %s149
      %p161 = scmp.eq.s32.totalorder %s28, 3
      %p162 = por %p160, %p161
      %p164 = scmp.ne.s32.totalorder %s149, %s163
      %p165 = scmp.eq.s32.totalorder %s28, 0
      %p166 = por %p164, %p165
      %s167 = ssub.s32 %s29, %s41
      %p168 = scmp.eq.s32.totalorder %s167, 0
      %s170 = sadd.s32 %s169, 1
      %s171 = scalar_select %p168, %s169, %s170
      %p174 = pneg %p168
      %p175 = scmp.eq.s32.totalorder %s22, 3
      %p176 = por %p174, %p175
      %p177 = scmp.ne.s32.totalorder %s169, %s172
      %p178 = scmp.eq.s32.totalorder %s22, 0
      %p179 = por %p177, %p178
      %p180 = scmp.ne.s32.totalorder %s169, %s172
      %p181 = scmp.eq.s32.totalorder %s27, 3
      %p182 = por %p180, %p181
      %p183 = scmp.ne.s32.totalorder %s172, %s173
      %p184 = scmp.eq.s32.totalorder %s27, 0
      %p185 = por %p183, %p184
      %p186 = scmp.ne.s32.totalorder %s172, %s173
      %p187 = scmp.eq.s32.totalorder %s28, 3
      %p188 = por %p186, %p187
      %p190 = scmp.ne.s32.totalorder %s173, %s189
      %p191 = scmp.eq.s32.totalorder %s28, 0
      %p192 = por %p190, %p191
      %s193 = ssub.s32 %s29, %s41
      %s194 = ssub.s32 %s30, %s37
      %s195 = sor.u32 %s193, %s194
      %p196 = scmp.eq.s32.totalorder %s195, 0
      %s198 = sadd.s32 %s197, 1
      %s199 = scalar_select %p196, %s197, %s198
      %p202 = pneg %p196
      %p203 = scmp.eq.s32.totalorder %s22, 3
      %p204 = por %p202, %p203
      %p205 = scmp.ne.s32.totalorder %s197, %s200
      %p206 = scmp.eq.s32.totalorder %s22, 0
      %p207 = por %p205, %p206
      %p208 = scmp.ne.s32.totalorder %s197, %s200
      %p209 = scmp.eq.s32.totalorder %s27, 3
      %p210 = por %p208, %p209
      %p211 = scmp.ne.s32.totalorder %s200, %s201
      %p212 = scmp.eq.s32.totalorder %s27, 0
      %p213 = por %p211, %p212
      %p214 = scmp.ne.s32.totalorder %s200, %s201
      %p215 = scmp.eq.s32.totalorder %s28, 3
      %p216 = por %p214, %p215
      %p218 = scmp.ne.s32.totalorder %s201, %s217
      %p219 = scmp.eq.s32.totalorder %s28, 0
      %p220 = por %p218, %p219
      %s221 = ssub.s32 %s29, %s41
      %p222 = scmp.eq.s32.totalorder %s221, 0
      %s224 = sadd.s32 %s223, 1
      %s225 = scalar_select %p222, %s223, %s224
      %p228 = pneg %p222
      %p229 = scmp.eq.s32.totalorder %s22, 3
      %p230 = por %p228, %p229
      %p231 = scmp.ne.s32.totalorder %s223, %s226
      %p232 = scmp.eq.s32.totalorder %s22, 0
      %p233 = por %p231, %p232
      %p234 = scmp.ne.s32.totalorder %s223, %s226
      %p235 = scmp.eq.s32.totalorder %s27, 3
      %p236 = por %p234, %p235
      %p237 = scmp.ne.s32.totalorder %s226, %s227
      %p238 = scmp.eq.s32.totalorder %s27, 0
      %p239 = por %p237, %p238
      %p240 = scmp.ne.s32.totalorder %s226, %s227
      %p241 = scmp.eq.s32.totalorder %s28, 3
      %p242 = por %p240, %p241
      %p244 = scmp.ne.s32.totalorder %s227, %s243
      %p245 = scmp.eq.s32.totalorder %s28, 0
      %p246 = por %p244, %p245
      %s247 = ssub.s32 %s29, %s41
      %p248 = scmp.eq.s32.totalorder %s247, 0
      %s250 = sadd.s32 %s249, 1
      %s251 = scalar_select %p248, %s249, %s250
      %p254 = pneg %p248
      %p255 = scmp.eq.s32.totalorder %s22, 3
      %p256 = por %p254, %p255
      %p257 = scmp.ne.s32.totalorder %s249, %s252
      %p258 = scmp.eq.s32.totalorder %s22, 0
      %p259 = por %p257, %p258
      %p260 = scmp.ne.s32.totalorder %s249, %s252
      %p261 = scmp.eq.s32.totalorder %s27, 3
      %p262 = por %p260, %p261
      %p263 = scmp.ne.s32.totalorder %s252, %s253
      %p264 = scmp.eq.s32.totalorder %s27, 0
      %p265 = por %p263, %p264
      %p266 = scmp.ne.s32.totalorder %s252, %s253
      %p267 = scmp.eq.s32.totalorder %s28, 3
      %p268 = por %p266, %p267
      %p270 = scmp.ne.s32.totalorder %s253, %s269
      %p271 = scmp.eq.s32.totalorder %s28, 0
      %p272 = por %p270, %p271
      %s273 = ssub.s32 %s29, %s41
      %p274 = scmp.eq.s32.totalorder %s273, 0
      %s276 = sadd.s32 %s275, 1
      %s277 = scalar_select %p274, %s275, %s276
      %p280 = pneg %p274
      %p281 = scmp.eq.s32.totalorder %s22, 3
      %p282 = por %p280, %p281
      %p283 = scmp.ne.s32.totalorder %s275, %s278
      %p284 = scmp.eq.s32.totalorder %s22, 0
      %p285 = por %p283, %p284
      %p286 = scmp.ne.s32.totalorder %s275, %s278
      %p287 = scmp.eq.s32.totalorder %s27, 3
      %p288 = por %p286, %p287
      %p289 = scmp.ne.s32.totalorder %s278, %s279
      %p290 = scmp.eq.s32.totalorder %s27, 0
      %p291 = por %p289, %p290
      %p292 = scmp.ne.s32.totalorder %s278, %s279
      %p293 = scmp.eq.s32.totalorder %s28, 3
      %p294 = por %p292, %p293
      %p296 = scmp.ne.s32.totalorder %s279, %s295
      %p297 = scmp.eq.s32.totalorder %s28, 0
      %p298 = por %p296, %p297
      %p299 = scmp.le.s32.totalorder 1, %s22
      %p300 = scmp.lt.s32.totalorder %s22, 5
      %p301 = pnand %p299, %p300
      %p302 = pneg %p301
      // Predicated region
      $region9: #{_sae_forward.1} parent=5 // pred_check
        _
      $region10: #{_sae_forward.1} parent=5 // pred_check_branch
        %304 = sbr.rel (%p301) target = $region12
      $region11: #{_sae_forward.1} parent=5 // pred_region
        %s305 = ssub.s32 %s22, 1
        // Predicated region
        $region13: #{_sae_forward.1} parent=11 // pred_check
          %p306 = pneg %p159
        $region14: #{_sae_forward.1} parent=11 // pred_check_branch
          %308 = sbr.rel (%p306) target = $region16
        $region15: #{_sae_forward.1} parent=11 // pred_region
          _
        $region16: #{_sae_forward.1} parent=11 // pred_fallthru
          _
      $region12: #{_sae_forward.1} parent=5 // pred_fallthru
        _
      %p309 = scmp.lt.s32.totalorder %s22, 4
      // Predicated region
      $region17: #{_sae_forward.1} parent=5 // pred_check
        %p310 = pneg %p309
      $region18: #{_sae_forward.1} parent=5 // pred_check_branch
        %312 = sbr.rel (%p310) target = $region20
      $region19: #{_sae_forward.1} parent=5 // pred_region
        // Predicated region
        $region21: #{_sae_forward.1} parent=19 // pred_check
          %p313 = pneg %p54
        $region22: #{_sae_forward.1} parent=19 // pred_check_branch
          %315 = sbr.rel (%p313) target = $region24
        $region23: #{_sae_forward.1} parent=19 // pred_region
          %s316 = smul.u32 16, %s29
          %p317 = scmp.lt.s32.totalorder %s316, 31
          %s318 = scalar_select %p317, %s316, 31
          %s319 = smul.addr %s318, 8
          %s320 = scalar_lea.vmem %s0, %s319
          %s321 = smul.u32 16, %s29
        $region24: #{_sae_forward.1} parent=19 // pred_fallthru
          _
        // Predicated region
        $region25: #{_sae_forward.1} parent=19 // pred_check
          %p322 = pneg %p80
        $region26: #{_sae_forward.1} parent=19 // pred_check_branch
          %324 = sbr.rel (%p322) target = $region28
        $region27: #{_sae_forward.1} parent=19 // pred_region
          %s325 = sand.u32 %s70, 1
          %s326 = sand.u32 %s70, 1
          %s327 = smul.addr %s326, 128
          %s328 = scalar_lea.vmem [#allocation4], %s327
          %s329 = smul.u32 2, %s30
          %s330 = smul.addr %s329, 4
          %s331 = scalar_lea.vmem %s1, %s330
          // Predicated region
          $region29: #{_sae_forward.1} parent=27 // pred_check
            _
          $region30: #{_sae_forward.1} parent=27 // pred_check_branch
            %333 = sbr.rel (0) target = $region32
          $region31: #{_sae_forward.1} parent=27 // pred_region
            // Predicated region
            $region33: #{_sae_forward.1} parent=31 // pred_check
              _
            $region34: #{_sae_forward.1} parent=31 // pred_check_branch
              %335 = sbr.rel (0) target = $region36
            $region35: #{_sae_forward.1} parent=31 // pred_region
              // Predicated region
              $region48: #{_sae_forward.1} parent=35 // pred_check
                _
              $region49: #{_sae_forward.1} parent=35 // pred_check_branch
                %380 = sbr.rel (0) target = $region51
              $region50: #{_sae_forward.1} parent=35 // pred_region
                loop: start=0, step=1, limit=1
                $region52: #{_sae_forward.1} parent=50 // loop_pre_header
                  _
                $region53: #{_sae_forward.1} parent=50 // loop_header
                  %s382 = sphi 0, %s386
                  %p383 = scmp.ge.s32.totalorder %s382, 1
                  %s387 = sphi %s331, %s331
                  %s388 = sphi %s328, %s328
                $region54: #{_sae_forward.1} parent=50 // loop_header_branch
                  %385 = sbr.rel (%p383) target = $region58
                $region55: #{_sae_forward.1} parent=50 // loop_body
                  %v389 = vld [vmem:[%s387] sm:$0xff]
                  %390 = vst [vmem:[%s388] sm:$0xff] %v389
                  %v391 = vld [vmem:[%s387 + $0x10] sm:$0xff]
                  %392 = vst [vmem:[%s388 + $0x8] sm:$0xff] %v391
                  %v393 = vld [vmem:[%s387 + $0x20] sm:$0xff]
                  %394 = vst [vmem:[%s388 + $0x10] sm:$0xff] %v393
                  %v395 = vld [vmem:[%s387 + $0x30] sm:$0xff]
                  %396 = vst [vmem:[%s388 + $0x18] sm:$0xff] %v395
                  %v397 = vld [vmem:[%s387 + $0x40] sm:$0xff]
                  %398 = vst [vmem:[%s388 + $0x20] sm:$0xff] %v397
                  %v399 = vld [vmem:[%s387 + $0x50] sm:$0xff]
                  %400 = vst [vmem:[%s388 + $0x28] sm:$0xff] %v399
                  %v401 = vld [vmem:[%s387 + $0x60] sm:$0xff]
                  %402 = vst [vmem:[%s388 + $0x30] sm:$0xff] %v401
                  %v403 = vld [vmem:[%s387 + $0x70] sm:$0xff]
                  %404 = vst [vmem:[%s388 + $0x38] sm:$0xff] %v403
                  %v405 = vld [vmem:[%s387 + $0x80] sm:$0xff]
                  %406 = vst [vmem:[%s388 + $0x40] sm:$0xff] %v405
                  %v407 = vld [vmem:[%s387 + $0x90] sm:$0xff]
                  %408 = vst [vmem:[%s388 + $0x48] sm:$0xff] %v407
                  %v409 = vld [vmem:[%s387 + $0xa0] sm:$0xff]
                  %410 = vst [vmem:[%s388 + $0x50] sm:$0xff] %v409
                  %v411 = vld [vmem:[%s387 + $0xb0] sm:$0xff]
                  %412 = vst [vmem:[%s388 + $0x58] sm:$0xff] %v411
                  %v413 = vld [vmem:[%s387 + $0xc0] sm:$0xff]
                  %414 = vst [vmem:[%s388 + $0x60] sm:$0xff] %v413
                  %v415 = vld [vmem:[%s387 + $0xd0] sm:$0xff]
                  %416 = vst [vmem:[%s388 + $0x68] sm:$0xff] %v415
                  %v417 = vld [vmem:[%s387 + $0xe0] sm:$0xff]
                  %418 = vst [vmem:[%s388 + $0x70] sm:$0xff] %v417
                  %v419 = vld [vmem:[%s387 + $0xf0] sm:$0xff]
                  %420 = vst [vmem:[%s388 + $0x78] sm:$0xff] %v419
                $region56: #{_sae_forward.1} parent=50 // loop_footer
                  %s386 = sadd.s32 1, %s382
                $region57: #{_sae_forward.1} parent=50 // loop_footer_branch
                  %381 = sbr.rel target = $region53
                $region58: #{_sae_forward.1} parent=50 // loop_exit
                  _
              $region51: #{_sae_forward.1} parent=35 // pred_fallthru
                _
              // Predicated region
              $region59: #{_sae_forward.1} parent=35 // pred_check
                _
              $region60: #{_sae_forward.1} parent=35 // pred_check_branch
                %422 = sbr.rel target = $region62
              $region61: #{_sae_forward.1} parent=35 // pred_region
                _
              $region62: #{_sae_forward.1} parent=35 // pred_fallthru
                _
            $region36: #{_sae_forward.1} parent=31 // pred_fallthru
              _
            // Predicated region
            $region37: #{_sae_forward.1} parent=31 // pred_check
              _
            $region38: #{_sae_forward.1} parent=31 // pred_check_branch
              %337 = sbr.rel target = $region40
            $region39: #{_sae_forward.1} parent=31 // pred_region
              loop: start=0, step=1, limit=1
              $region41: #{_sae_forward.1} parent=39 // loop_pre_header
                _
              $region42: #{_sae_forward.1} parent=39 // loop_header
                %s340 = sphi 0, %s344
                %p341 = scmp.ge.s32.totalorder %s340, 1
                %s345 = sphi %s331, %s331
                %s346 = sphi %s328, %s328
              $region43: #{_sae_forward.1} parent=39 // loop_header_branch
                %343 = sbr.rel (%p341) target = $region47
              $region44: #{_sae_forward.1} parent=39 // loop_body
                %v347 = vld [vmem:[%s345] sm:$0xff]
                %348 = vst [vmem:[%s346] sm:$0xff] %v347
                %v349 = vld [vmem:[%s345 + $0x10] sm:$0xff]
                %350 = vst [vmem:[%s346 + $0x8] sm:$0xff] %v349
                %v351 = vld [vmem:[%s345 + $0x20] sm:$0xff]
                %352 = vst [vmem:[%s346 + $0x10] sm:$0xff] %v351
                %v353 = vld [vmem:[%s345 + $0x30] sm:$0xff]
                %354 = vst [vmem:[%s346 + $0x18] sm:$0xff] %v353
                %v355 = vld [vmem:[%s345 + $0x40] sm:$0xff]
                %356 = vst [vmem:[%s346 + $0x20] sm:$0xff] %v355
                %v357 = vld [vmem:[%s345 + $0x50] sm:$0xff]
                %358 = vst [vmem:[%s346 + $0x28] sm:$0xff] %v357
                %v359 = vld [vmem:[%s345 + $0x60] sm:$0xff]
                %360 = vst [vmem:[%s346 + $0x30] sm:$0xff] %v359
                %v361 = vld [vmem:[%s345 + $0x70] sm:$0xff]
                %362 = vst [vmem:[%s346 + $0x38] sm:$0xff] %v361
                %v363 = vld [vmem:[%s345 + $0x80] sm:$0xff]
                %364 = vst [vmem:[%s346 + $0x40] sm:$0xff] %v363
                %v365 = vld [vmem:[%s345 + $0x90] sm:$0xff]
                %366 = vst [vmem:[%s346 + $0x48] sm:$0xff] %v365
                %v367 = vld [vmem:[%s345 + $0xa0] sm:$0xff]
                %368 = vst [vmem:[%s346 + $0x50] sm:$0xff] %v367
                %v369 = vld [vmem:[%s345 + $0xb0] sm:$0xff]
                %370 = vst [vmem:[%s346 + $0x58] sm:$0xff] %v369
                %v371 = vld [vmem:[%s345 + $0xc0] sm:$0xff]
                %372 = vst [vmem:[%s346 + $0x60] sm:$0xff] %v371
                %v373 = vld [vmem:[%s345 + $0xd0] sm:$0xff]
                %374 = vst [vmem:[%s346 + $0x68] sm:$0xff] %v373
                %v375 = vld [vmem:[%s345 + $0xe0] sm:$0xff]
                %376 = vst [vmem:[%s346 + $0x70] sm:$0xff] %v375
                %v377 = vld [vmem:[%s345 + $0xf0] sm:$0xff]
                %378 = vst [vmem:[%s346 + $0x78] sm:$0xff] %v377
              $region45: #{_sae_forward.1} parent=39 // loop_footer
                %s344 = sadd.s32 1, %s340
              $region46: #{_sae_forward.1} parent=39 // loop_footer_branch
                %339 = sbr.rel target = $region42
              $region47: #{_sae_forward.1} parent=39 // loop_exit
                _
            $region40: #{_sae_forward.1} parent=31 // pred_fallthru
              _
          $region32: #{_sae_forward.1} parent=27 // pred_fallthru
            _
          %423 = vnop
        $region28: #{_sae_forward.1} parent=19 // pred_fallthru
          _
        // Predicated region
        $region63: #{_sae_forward.1} parent=19 // pred_check
          %p424 = pneg %p106
        $region64: #{_sae_forward.1} parent=19 // pred_check_branch
          %426 = sbr.rel (%p424) target = $region66
        $region65: #{_sae_forward.1} parent=19 // pred_region
          %s427 = smul.u32 2, %s30
          %p428 = scmp.lt.s32.totalorder %s427, 3
          %s429 = scalar_select %p428, %s427, 3
          %s430 = scalar_lea.vmem %s2, %s429
          %s431 = smul.u32 2, %s30
        $region66: #{_sae_forward.1} parent=19 // pred_fallthru
          _
        // Predicated region
        $region67: #{_sae_forward.1} parent=19 // pred_check
          %p432 = pneg %p132
        $region68: #{_sae_forward.1} parent=19 // pred_check_branch
          %434 = sbr.rel (%p432) target = $region70
        $region69: #{_sae_forward.1} parent=19 // pred_region
          %s435 = smul.u32 32, %s30
          %p436 = scmp.lt.s32.totalorder %s435, 63
          %s437 = scalar_select %p436, %s435, 63
          %s438 = smul.addr %s437, 4
          %s439 = scalar_lea.vmem %s3, %s438
          %s440 = smul.u32 32, %s30
        $region70: #{_sae_forward.1} parent=19 // pred_fallthru
          _
      $region20: #{_sae_forward.1} parent=5 // pred_fallthru
        _
      %p441 = scmp.le.s32.totalorder 1, %s22
      %p442 = scmp.lt.s32.totalorder %s22, 5
      %p443 = pnand %p441, %p442
      %p444 = pneg %p443
      // Predicated region
      $region71: #{_sae_forward.1} parent=5 // pred_check
        _
      $region72: #{_sae_forward.1} parent=5 // pred_check_branch
        %446 = sbr.rel (%p443) target = $region74
      $region73: #{_sae_forward.1} parent=5 // pred_region
        %s447 = ssub.s32 %s22, 1
        %s448 = sand.u32 %s73, 1
        %s449 = sand.u32 %s73, 1
        %s450 = smul.addr %s449, 128
        %s451 = scalar_lea.vmem [#allocation4], %s450
        // Predicated region
        $region75: #{_sae_forward.1} parent=73 // pred_check
          %p452 = pneg %p86
        $region76: #{_sae_forward.1} parent=73 // pred_check_branch
          %454 = sbr.rel (%p452) target = $region78
        $region77: #{_sae_forward.1} parent=73 // pred_region
          _
        $region78: #{_sae_forward.1} parent=73 // pred_fallthru
          _
        %s455 = smul.u32 16, %s31
        %p456 = scmp.lt.s32.totalorder %s455, 31
        %s457 = scalar_select %p456, %s455, 31
        %s458 = smul.addr %s457, 8
        %s459 = scalar_lea.vmem %s0, %s458
        %p460 = pneg %p60
        %p461 = pneg %p57
        %s462 = sand.u32 %s73, 1
        %s463 = sand.u32 %s73, 1
        %s464 = smul.addr %s463, 128
        %s465 = scalar_lea.vmem [#allocation4], %s464
        %p466 = pneg %p86
        %p467 = pneg %p83
        %s468 = smul.u32 2, %s32
        %p469 = scmp.lt.s32.totalorder %s468, 3
        %s470 = scalar_select %p469, %s468, 3
        %s471 = scalar_lea.vmem %s2, %s470
        %p472 = pneg %p112
        %p473 = pneg %p109
        %s474 = smul.u32 32, %s32
        %p475 = scmp.lt.s32.totalorder %s474, 63
        %s476 = scalar_select %p475, %s474, 63
        %s477 = smul.addr %s476, 4
        %s478 = scalar_lea.vmem %s3, %s477
        %p479 = pneg %p138
        %p480 = pneg %p135
        %p481 = pneg %p159
        %p482 = pneg %p156
        %p483 = pneg %p185
        %p484 = pneg %p182
        %s485 = sand.u32 %s172, 1
        %s486 = scalar_lea.sflag [#allocation6], %s485
        %s487 = sand.u32 %s172, 1
        %s488 = smul.addr %s487, 128
        %s489 = scalar_lea.vmem [#allocation5], %s488
        %p490 = pneg %p213
        %p491 = pneg %p210
        %s492 = sand.u32 %s200, 1
        %s493 = sand.u32 %s200, 1
        %s494 = smul.addr %s493, 128
        %s495 = scalar_lea.vmem [#allocation7], %s494
        %p496 = pneg %p239
        %p497 = pneg %p236
        %s498 = smul.u32 16, %s31
        %p499 = scmp.lt.s32.totalorder %s498, 31
        %s500 = scalar_select %p499, %s498, 31
        %s501 = smul.addr %s500, 8
        %s502 = scalar_lea.vmem %s7, %s501
        %p503 = pneg %p265
        %p504 = pneg %p262
        %s505 = smul.u32 16, %s31
        %p506 = scmp.lt.s32.totalorder %s505, 31
        %s507 = scalar_select %p506, %s505, 31
        %s508 = smul.addr %s507, 8
        %s509 = scalar_lea.vmem %s8, %s508
        %p510 = pneg %p291
        %p511 = pneg %p288
        %s512 = sand.u32 %s278, 1
        %s513 = scalar_lea.sflag [#allocation9], %s512
        %s514 = sand.u32 %s278, 1
        %s515 = smul.addr %s514, 128
        %s516 = scalar_lea.vmem [#allocation8], %s515
        %s517 = smul.u32 16, %s31
        %p518 = scmp.lt.s32.totalorder %s517, 31
        %s519 = scalar_select %p518, %s517, 31
        %s520 = smul.addr %s519, 8
        %s521 = scalar_lea.vmem %s0, %s520
        %s522 = smul.u32 16, %s31
        %s523 = smul.u32 2, %s32
        %s524 = smul.u32 2, %s32
        %p525 = scmp.lt.s32.totalorder %s524, 3
        %s526 = scalar_select %p525, %s524, 3
        %s527 = scalar_lea.vmem %s2, %s526
        %s528 = smul.u32 2, %s32
        %s529 = smul.u32 32, %s32
        %p530 = scmp.lt.s32.totalorder %s529, 63
        %s531 = scalar_select %p530, %s529, 63
        %s532 = smul.addr %s531, 4
        %s533 = scalar_lea.vmem %s3, %s532
        %s534 = smul.u32 32, %s32
        %s535 = smul.u32 16, %s31
        %s536 = smul.u32 16, %s31
        %s537 = smul.u32 2, %s32
        %s538 = smul.u32 16, %s31
        %p539 = scmp.lt.s32.totalorder %s538, 31
        %s540 = scalar_select %p539, %s538, 31
        %s541 = smul.addr %s540, 8
        %s542 = scalar_lea.vmem %s7, %s541
        %s543 = smul.u32 16, %s31
        %s544 = smul.u32 16, %s31
        %p545 = scmp.lt.s32.totalorder %s544, 31
        %s546 = scalar_select %p545, %s544, 31
        %s547 = smul.addr %s546, 8
        %s548 = scalar_lea.vmem %s8, %s547
        %s549 = smul.u32 16, %s31
        %s550 = smul.u32 16, %s31
        %p552 = scmp.eq.s32.totalorder %s32, 0
        // Predicated region
        $region79: #{_sae_forward.1} parent=73 // pred_check
          %p553 = pneg %p552
        $region80: #{_sae_forward.1} parent=73 // pred_check_branch
          %555 = sbr.rel (%p553) target = $region82
        $region81: #{_sae_forward.1} parent=73 // pred_region
          %v556 = vld [vmem:[%s521] sm:$0xff]
          %v557 = vld [vmem:[%s521 + $0x8] sm:$0xff]
          %v558 = vld [vmem:[%s521 + $0x10] sm:$0xff]
          %v559 = vld [vmem:[%s521 + $0x18] sm:$0xff]
          %v560 = vld [vmem:[%s521 + $0x20] sm:$0xff]
          %v561 = vld [vmem:[%s521 + $0x28] sm:$0xff]
          %v562 = vld [vmem:[%s521 + $0x30] sm:$0xff]
          %v563 = vld [vmem:[%s521 + $0x38] sm:$0xff]
          %v564 = vld [vmem:[%s521 + $0x40] sm:$0xff]
          %v565 = vld [vmem:[%s521 + $0x48] sm:$0xff]
          %v566 = vld [vmem:[%s521 + $0x50] sm:$0xff]
          %v567 = vld [vmem:[%s521 + $0x58] sm:$0xff]
          %v568 = vld [vmem:[%s521 + $0x60] sm:$0xff]
          %v569 = vld [vmem:[%s521 + $0x68] sm:$0xff]
          %v570 = vld [vmem:[%s521 + $0x70] sm:$0xff]
          %v571 = vld [vmem:[%s521 + $0x78] sm:$0xff]
          %572 = vadd.xlane.f32.xlu0 %v556
          %v573 = vpop.xlane.xlu0 %572
          %574 = vadd.xlane.f32.xlu0 %v557
          %v575 = vpop.xlane.xlu0 %574
          %576 = vadd.xlane.f32.xlu0 %v558
          %v577 = vpop.xlane.xlu0 %576
          %578 = vadd.xlane.f32.xlu0 %v559
          %v579 = vpop.xlane.xlu0 %578
          %580 = vadd.xlane.f32.xlu0 %v560
          %v581 = vpop.xlane.xlu0 %580
          %582 = vadd.xlane.f32.xlu0 %v561
          %v583 = vpop.xlane.xlu0 %582
          %584 = vadd.xlane.f32.xlu0 %v562
          %v585 = vpop.xlane.xlu0 %584
          %586 = vadd.xlane.f32.xlu0 %v563
          %v587 = vpop.xlane.xlu0 %586
          %588 = vadd.xlane.f32.xlu0 %v564
          %v589 = vpop.xlane.xlu0 %588
          %590 = vadd.xlane.f32.xlu0 %v565
          %v591 = vpop.xlane.xlu0 %590
          %592 = vadd.xlane.f32.xlu0 %v566
          %v593 = vpop.xlane.xlu0 %592
          %594 = vadd.xlane.f32.xlu0 %v567
          %v595 = vpop.xlane.xlu0 %594
          %596 = vadd.xlane.f32.xlu0 %v568
          %v597 = vpop.xlane.xlu0 %596
          %598 = vadd.xlane.f32.xlu0 %v569
          %v599 = vpop.xlane.xlu0 %598
          %600 = vadd.xlane.f32.xlu0 %v570
          %v601 = vpop.xlane.xlu0 %600
          %602 = vadd.xlane.f32.xlu0 %v571
          %v603 = vpop.xlane.xlu0 %602
          %v604 = vrcp.pop 128.0
          %v605 = vmul.f32 %v573, %v604
          %v606 = vmul.f32 %v575, %v604
          %v607 = vmul.f32 %v577, %v604
          %v608 = vmul.f32 %v579, %v604
          %v609 = vmul.f32 %v581, %v604
          %v610 = vmul.f32 %v583, %v604
          %v611 = vmul.f32 %v585, %v604
          %v612 = vmul.f32 %v587, %v604
          %v613 = vmul.f32 %v589, %v604
          %v614 = vmul.f32 %v591, %v604
          %v615 = vmul.f32 %v593, %v604
          %v616 = vmul.f32 %v595, %v604
          %v617 = vmul.f32 %v597, %v604
          %v618 = vmul.f32 %v599, %v604
          %v619 = vmul.f32 %v601, %v604
          %v620 = vmul.f32 %v603, %v604
          %v621 = vsub.f32 %v556, %v605
          %v622 = vsub.f32 %v557, %v606
          %v623 = vsub.f32 %v558, %v607
          %v624 = vsub.f32 %v559, %v608
          %v625 = vsub.f32 %v560, %v609
          %v626 = vsub.f32 %v561, %v610
          %v627 = vsub.f32 %v562, %v611
          %v628 = vsub.f32 %v563, %v612
          %v629 = vsub.f32 %v564, %v613
          %v630 = vsub.f32 %v565, %v614
          %v631 = vsub.f32 %v566, %v615
          %v632 = vsub.f32 %v567, %v616
          %v633 = vsub.f32 %v568, %v617
          %v634 = vsub.f32 %v569, %v618
          %v635 = vsub.f32 %v570, %v619
          %v636 = vsub.f32 %v571, %v620
          %v637 = vmul.f32 %v621, %v621
          %v638 = vmul.f32 %v622, %v622
          %v639 = vmul.f32 %v623, %v623
          %v640 = vmul.f32 %v624, %v624
          %v641 = vmul.f32 %v625, %v625
          %v642 = vmul.f32 %v626, %v626
          %v643 = vmul.f32 %v627, %v627
          %v644 = vmul.f32 %v628, %v628
          %v645 = vmul.f32 %v629, %v629
          %v646 = vmul.f32 %v630, %v630
          %v647 = vmul.f32 %v631, %v631
          %v648 = vmul.f32 %v632, %v632
          %v649 = vmul.f32 %v633, %v633
          %v650 = vmul.f32 %v634, %v634
          %v651 = vmul.f32 %v635, %v635
          %v652 = vmul.f32 %v636, %v636
          %653 = vadd.xlane.f32.xlu0 %v637
          %v654 = vpop.xlane.xlu0 %653
          %655 = vadd.xlane.f32.xlu0 %v638
          %v656 = vpop.xlane.xlu0 %655
          %657 = vadd.xlane.f32.xlu0 %v639
          %v658 = vpop.xlane.xlu0 %657
          %659 = vadd.xlane.f32.xlu0 %v640
          %v660 = vpop.xlane.xlu0 %659
          %661 = vadd.xlane.f32.xlu0 %v641
          %v662 = vpop.xlane.xlu0 %661
          %663 = vadd.xlane.f32.xlu0 %v642
          %v664 = vpop.xlane.xlu0 %663
          %665 = vadd.xlane.f32.xlu0 %v643
          %v666 = vpop.xlane.xlu0 %665
          %667 = vadd.xlane.f32.xlu0 %v644
          %v668 = vpop.xlane.xlu0 %667
          %669 = vadd.xlane.f32.xlu0 %v645
          %v670 = vpop.xlane.xlu0 %669
          %671 = vadd.xlane.f32.xlu0 %v646
          %v672 = vpop.xlane.xlu0 %671
          %673 = vadd.xlane.f32.xlu0 %v647
          %v674 = vpop.xlane.xlu0 %673
          %675 = vadd.xlane.f32.xlu0 %v648
          %v676 = vpop.xlane.xlu0 %675
          %677 = vadd.xlane.f32.xlu0 %v649
          %v678 = vpop.xlane.xlu0 %677
          %679 = vadd.xlane.f32.xlu0 %v650
          %v680 = vpop.xlane.xlu0 %679
          %681 = vadd.xlane.f32.xlu0 %v651
          %v682 = vpop.xlane.xlu0 %681
          %683 = vadd.xlane.f32.xlu0 %v652
          %v684 = vpop.xlane.xlu0 %683
          %v685 = vmul.f32 %v654, 0.007874016
          %v686 = vmul.f32 %v656, 0.007874016
          %v687 = vmul.f32 %v658, 0.007874016
          %v688 = vmul.f32 %v660, 0.007874016
          %v689 = vmul.f32 %v662, 0.007874016
          %v690 = vmul.f32 %v664, 0.007874016
          %v691 = vmul.f32 %v666, 0.007874016
          %v692 = vmul.f32 %v668, 0.007874016
          %v693 = vmul.f32 %v670, 0.007874016
          %v694 = vmul.f32 %v672, 0.007874016
          %v695 = vmul.f32 %v674, 0.007874016
          %v696 = vmul.f32 %v676, 0.007874016
          %v697 = vmul.f32 %v678, 0.007874016
          %v698 = vmul.f32 %v680, 0.007874016
          %v699 = vmul.f32 %v682, 0.007874016
          %v700 = vmul.f32 %v684, 0.007874016
          %v701 = vrsqrt.pop %v685
          %v702 = vmul.f32 %v685, %v701
          %vm703 = vcmp.eq.f32.partialorder %v685, inf
          %v704 = vsel %vm703, %v685, %v702
          %vm705 = vcmp.eq.f32.partialorder %v685, 0.0
          %v706 = vand.u32 %v685, 2147483648
          %v707 = vsel %vm705, %v706, %v704
          %v708 = vrsqrt.pop %v686
          %v709 = vmul.f32 %v686, %v708
          %vm710 = vcmp.eq.f32.partialorder %v686, inf
          %v711 = vsel %vm710, %v686, %v709
          %vm712 = vcmp.eq.f32.partialorder %v686, 0.0
          %v713 = vand.u32 %v686, 2147483648
          %v714 = vsel %vm712, %v713, %v711
          %v715 = vrsqrt.pop %v687
          %v716 = vmul.f32 %v687, %v715
          %vm717 = vcmp.eq.f32.partialorder %v687, inf
          %v718 = vsel %vm717, %v687, %v716
          %vm719 = vcmp.eq.f32.partialorder %v687, 0.0
          %v720 = vand.u32 %v687, 2147483648
          %v721 = vsel %vm719, %v720, %v718
          %v722 = vrsqrt.pop %v688
          %v723 = vmul.f32 %v688, %v722
          %vm724 = vcmp.eq.f32.partialorder %v688, inf
          %v725 = vsel %vm724, %v688, %v723
          %vm726 = vcmp.eq.f32.partialorder %v688, 0.0
          %v727 = vand.u32 %v688, 2147483648
          %v728 = vsel %vm726, %v727, %v725
          %v729 = vrsqrt.pop %v689
          %v730 = vmul.f32 %v689, %v729
          %vm731 = vcmp.eq.f32.partialorder %v689, inf
          %v732 = vsel %vm731, %v689, %v730
          %vm733 = vcmp.eq.f32.partialorder %v689, 0.0
          %v734 = vand.u32 %v689, 2147483648
          %v735 = vsel %vm733, %v734, %v732
          %v736 = vrsqrt.pop %v690
          %v737 = vmul.f32 %v690, %v736
          %vm738 = vcmp.eq.f32.partialorder %v690, inf
          %v739 = vsel %vm738, %v690, %v737
          %vm740 = vcmp.eq.f32.partialorder %v690, 0.0
          %v741 = vand.u32 %v690, 2147483648
          %v742 = vsel %vm740, %v741, %v739
          %v743 = vrsqrt.pop %v691
          %v744 = vmul.f32 %v691, %v743
          %vm745 = vcmp.eq.f32.partialorder %v691, inf
          %v746 = vsel %vm745, %v691, %v744
          %vm747 = vcmp.eq.f32.partialorder %v691, 0.0
          %v748 = vand.u32 %v691, 2147483648
          %v749 = vsel %vm747, %v748, %v746
          %v750 = vrsqrt.pop %v692
          %v751 = vmul.f32 %v692, %v750
          %vm752 = vcmp.eq.f32.partialorder %v692, inf
          %v753 = vsel %vm752, %v692, %v751
          %vm754 = vcmp.eq.f32.partialorder %v692, 0.0
          %v755 = vand.u32 %v692, 2147483648
          %v756 = vsel %vm754, %v755, %v753
          %v757 = vrsqrt.pop %v693
          %v758 = vmul.f32 %v693, %v757
          %vm759 = vcmp.eq.f32.partialorder %v693, inf
          %v760 = vsel %vm759, %v693, %v758
          %vm761 = vcmp.eq.f32.partialorder %v693, 0.0
          %v762 = vand.u32 %v693, 2147483648
          %v763 = vsel %vm761, %v762, %v760
          %v764 = vrsqrt.pop %v694
          %v765 = vmul.f32 %v694, %v764
          %vm766 = vcmp.eq.f32.partialorder %v694, inf
          %v767 = vsel %vm766, %v694, %v765
          %vm768 = vcmp.eq.f32.partialorder %v694, 0.0
          %v769 = vand.u32 %v694, 2147483648
          %v770 = vsel %vm768, %v769, %v767
          %v771 = vrsqrt.pop %v695
          %v772 = vmul.f32 %v695, %v771
          %vm773 = vcmp.eq.f32.partialorder %v695, inf
          %v774 = vsel %vm773, %v695, %v772
          %vm775 = vcmp.eq.f32.partialorder %v695, 0.0
          %v776 = vand.u32 %v695, 2147483648
          %v777 = vsel %vm775, %v776, %v774
          %v778 = vrsqrt.pop %v696
          %v779 = vmul.f32 %v696, %v778
          %vm780 = vcmp.eq.f32.partialorder %v696, inf
          %v781 = vsel %vm780, %v696, %v779
          %vm782 = vcmp.eq.f32.partialorder %v696, 0.0
          %v783 = vand.u32 %v696, 2147483648
          %v784 = vsel %vm782, %v783, %v781
          %v785 = vrsqrt.pop %v697
          %v786 = vmul.f32 %v697, %v785
          %vm787 = vcmp.eq.f32.partialorder %v697, inf
          %v788 = vsel %vm787, %v697, %v786
          %vm789 = vcmp.eq.f32.partialorder %v697, 0.0
          %v790 = vand.u32 %v697, 2147483648
          %v791 = vsel %vm789, %v790, %v788
          %v792 = vrsqrt.pop %v698
          %v793 = vmul.f32 %v698, %v792
          %vm794 = vcmp.eq.f32.partialorder %v698, inf
          %v795 = vsel %vm794, %v698, %v793
          %vm796 = vcmp.eq.f32.partialorder %v698, 0.0
          %v797 = vand.u32 %v698, 2147483648
          %v798 = vsel %vm796, %v797, %v795
          %v799 = vrsqrt.pop %v699
          %v800 = vmul.f32 %v699, %v799
          %vm801 = vcmp.eq.f32.partialorder %v699, inf
          %v802 = vsel %vm801, %v699, %v800
          %vm803 = vcmp.eq.f32.partialorder %v699, 0.0
          %v804 = vand.u32 %v699, 2147483648
          %v805 = vsel %vm803, %v804, %v802
          %v806 = vrsqrt.pop %v700
          %v807 = vmul.f32 %v700, %v806
          %vm808 = vcmp.eq.f32.partialorder %v700, inf
          %v809 = vsel %vm808, %v700, %v807
          %vm810 = vcmp.eq.f32.partialorder %v700, 0.0
          %v811 = vand.u32 %v700, 2147483648
          %v812 = vsel %vm810, %v811, %v809
          %v813 = vadd.f32 %v707, 1e-07
          %v814 = vadd.f32 %v714, 1e-07
          %v815 = vadd.f32 %v721, 1e-07
          %v816 = vadd.f32 %v728, 1e-07
          %v817 = vadd.f32 %v735, 1e-07
          %v818 = vadd.f32 %v742, 1e-07
          %v819 = vadd.f32 %v749, 1e-07
          %v820 = vadd.f32 %v756, 1e-07
          %v821 = vadd.f32 %v763, 1e-07
          %v822 = vadd.f32 %v770, 1e-07
          %v823 = vadd.f32 %v777, 1e-07
          %v824 = vadd.f32 %v784, 1e-07
          %v825 = vadd.f32 %v791, 1e-07
          %v826 = vadd.f32 %v798, 1e-07
          %v827 = vadd.f32 %v805, 1e-07
          %v828 = vadd.f32 %v812, 1e-07
          %v829 = vrcp.pop %v813
          %v830 = vmul.f32 1.0, %v829
          %v831 = vrcp.pop %v814
          %v832 = vmul.f32 1.0, %v831
          %v833 = vrcp.pop %v815
          %v834 = vmul.f32 1.0, %v833
          %v835 = vrcp.pop %v816
          %v836 = vmul.f32 1.0, %v835
          %v837 = vrcp.pop %v817
          %v838 = vmul.f32 1.0, %v837
          %v839 = vrcp.pop %v818
          %v840 = vmul.f32 1.0, %v839
          %v841 = vrcp.pop %v819
          %v842 = vmul.f32 1.0, %v841
          %v843 = vrcp.pop %v820
          %v844 = vmul.f32 1.0, %v843
          %v845 = vrcp.pop %v821
          %v846 = vmul.f32 1.0, %v845
          %v847 = vrcp.pop %v822
          %v848 = vmul.f32 1.0, %v847
          %v849 = vrcp.pop %v823
          %v850 = vmul.f32 1.0, %v849
          %v851 = vrcp.pop %v824
          %v852 = vmul.f32 1.0, %v851
          %v853 = vrcp.pop %v825
          %v854 = vmul.f32 1.0, %v853
          %v855 = vrcp.pop %v826
          %v856 = vmul.f32 1.0, %v855
          %v857 = vrcp.pop %v827
          %v858 = vmul.f32 1.0, %v857
          %v859 = vrcp.pop %v828
          %v860 = vmul.f32 1.0, %v859
          %v861 = vmul.f32 %v621, %v830
          %v862 = vmul.f32 %v622, %v832
          %v863 = vmul.f32 %v623, %v834
          %v864 = vmul.f32 %v624, %v836
          %v865 = vmul.f32 %v625, %v838
          %v866 = vmul.f32 %v626, %v840
          %v867 = vmul.f32 %v627, %v842
          %v868 = vmul.f32 %v628, %v844
          %v869 = vmul.f32 %v629, %v846
          %v870 = vmul.f32 %v630, %v848
          %v871 = vmul.f32 %v631, %v850
          %v872 = vmul.f32 %v632, %v852
          %v873 = vmul.f32 %v633, %v854
          %v874 = vmul.f32 %v634, %v856
          %v875 = vmul.f32 %v635, %v858
          %v876 = vmul.f32 %v636, %v860
          %vm877 = vcmask 7168
          %878 = vst.msk [vmem:[%s542] sm:$0xff] %vm877, %v605
          %879 = vst.msk [vmem:[%s542 + $0x8] sm:$0xff] %vm877, %v606
          %880 = vst.msk [vmem:[%s542 + $0x10] sm:$0xff] %vm877, %v607
          %881 = vst.msk [vmem:[%s542 + $0x18] sm:$0xff] %vm877, %v608
          %882 = vst.msk [vmem:[%s542 + $0x20] sm:$0xff] %vm877, %v609
          %883 = vst.msk [vmem:[%s542 + $0x28] sm:$0xff] %vm877, %v610
          %884 = vst.msk [vmem:[%s542 + $0x30] sm:$0xff] %vm877, %v611
          %885 = vst.msk [vmem:[%s542 + $0x38] sm:$0xff] %vm877, %v612
          %886 = vst.msk [vmem:[%s542 + $0x40] sm:$0xff] %vm877, %v613
          %887 = vst.msk [vmem:[%s542 + $0x48] sm:$0xff] %vm877, %v614
          %888 = vst.msk [vmem:[%s542 + $0x50] sm:$0xff] %vm877, %v615
          %889 = vst.msk [vmem:[%s542 + $0x58] sm:$0xff] %vm877, %v616
          %890 = vst.msk [vmem:[%s542 + $0x60] sm:$0xff] %vm877, %v617
          %891 = vst.msk [vmem:[%s542 + $0x68] sm:$0xff] %vm877, %v618
          %892 = vst.msk [vmem:[%s542 + $0x70] sm:$0xff] %vm877, %v619
          %893 = vst.msk [vmem:[%s542 + $0x78] sm:$0xff] %vm877, %v620
          %894 = vst.msk [vmem:[%s548] sm:$0xff] %vm877, %v813
          %895 = vst.msk [vmem:[%s548 + $0x8] sm:$0xff] %vm877, %v814
          %896 = vst.msk [vmem:[%s548 + $0x10] sm:$0xff] %vm877, %v815
          %897 = vst.msk [vmem:[%s548 + $0x18] sm:$0xff] %vm877, %v816
          %898 = vst.msk [vmem:[%s548 + $0x20] sm:$0xff] %vm877, %v817
          %899 = vst.msk [vmem:[%s548 + $0x28] sm:$0xff] %vm877, %v818
          %900 = vst.msk [vmem:[%s548 + $0x30] sm:$0xff] %vm877, %v819
          %901 = vst.msk [vmem:[%s548 + $0x38] sm:$0xff] %vm877, %v820
          %902 = vst.msk [vmem:[%s548 + $0x40] sm:$0xff] %vm877, %v821
          %903 = vst.msk [vmem:[%s548 + $0x48] sm:$0xff] %vm877, %v822
          %904 = vst.msk [vmem:[%s548 + $0x50] sm:$0xff] %vm877, %v823
          %905 = vst.msk [vmem:[%s548 + $0x58] sm:$0xff] %vm877, %v824
          %906 = vst.msk [vmem:[%s548 + $0x60] sm:$0xff] %vm877, %v825
          %907 = vst.msk [vmem:[%s548 + $0x68] sm:$0xff] %vm877, %v826
          %908 = vst.msk [vmem:[%s548 + $0x70] sm:$0xff] %vm877, %v827
          %909 = vst.msk [vmem:[%s548 + $0x78] sm:$0xff] %vm877, %v828
          %910 = vst [vmem:[%s516] sm:$0xff] %v861
          %911 = vst [vmem:[%s516 + $0x8] sm:$0xff] %v862
          %912 = vst [vmem:[%s516 + $0x10] sm:$0xff] %v863
          %913 = vst [vmem:[%s516 + $0x18] sm:$0xff] %v864
          %914 = vst [vmem:[%s516 + $0x20] sm:$0xff] %v865
          %915 = vst [vmem:[%s516 + $0x28] sm:$0xff] %v866
          %916 = vst [vmem:[%s516 + $0x30] sm:$0xff] %v867
          %917 = vst [vmem:[%s516 + $0x38] sm:$0xff] %v868
          %918 = vst [vmem:[%s516 + $0x40] sm:$0xff] %v869
          %919 = vst [vmem:[%s516 + $0x48] sm:$0xff] %v870
          %920 = vst [vmem:[%s516 + $0x50] sm:$0xff] %v871
          %921 = vst [vmem:[%s516 + $0x58] sm:$0xff] %v872
          %922 = vst [vmem:[%s516 + $0x60] sm:$0xff] %v873
          %923 = vst [vmem:[%s516 + $0x68] sm:$0xff] %v874
          %924 = vst [vmem:[%s516 + $0x70] sm:$0xff] %v875
          %925 = vst [vmem:[%s516 + $0x78] sm:$0xff] %v876
          %v926 = vld [vmem:[%s4] sm:$0x1]
          %v928 = vlaneseq
          %v929 = vshrl.u32 %v928, 7
          %v930 = vsub.s32 0, %v929
          %v931 = vrot.slane %v926, %v930
          %v933 = vsub.f32 %v861, %v931
          %v934 = vsub.f32 %v862, %v931
          %v935 = vsub.f32 %v863, %v931
          %v936 = vsub.f32 %v864, %v931
          %v937 = vsub.f32 %v865, %v931
          %v938 = vsub.f32 %v866, %v931
          %v939 = vsub.f32 %v867, %v931
          %v940 = vsub.f32 %v868, %v931
          %v941 = vsub.f32 %v869, %v931
          %v942 = vsub.f32 %v870, %v931
          %v943 = vsub.f32 %v871, %v931
          %v944 = vsub.f32 %v872, %v931
          %v945 = vsub.f32 %v873, %v931
          %v946 = vsub.f32 %v874, %v931
          %v947 = vsub.f32 %v875, %v931
          %v948 = vsub.f32 %v876, %v931
          %v949 = vpack.c.bf16 %v934, %v933
          %v950 = vpack.c.bf16 %v936, %v935
          %v951 = vpack.c.bf16 %v938, %v937
          %v952 = vpack.c.bf16 %v940, %v939
          %v953 = vpack.c.bf16 %v942, %v941
          %v954 = vpack.c.bf16 %v944, %v943
          %v955 = vpack.c.bf16 %v946, %v945
          %v956 = vpack.c.bf16 %v948, %v947
          %957 = vst [vmem:[#allocation3] sm:$0xff] %v949
          %958 = vst [vmem:[#allocation3 + $0x8] sm:$0xff] %v950
          %959 = vst [vmem:[#allocation3 + $0x10] sm:$0xff] %v951
          %960 = vst [vmem:[#allocation3 + $0x18] sm:$0xff] %v952
          %961 = vst [vmem:[#allocation3 + $0x20] sm:$0xff] %v953
          %962 = vst [vmem:[#allocation3 + $0x28] sm:$0xff] %v954
          %963 = vst [vmem:[#allocation3 + $0x30] sm:$0xff] %v955
          %964 = vst [vmem:[#allocation3 + $0x38] sm:$0xff] %v956
          %965 = vst [vmem:[#allocation2] sm:$0xff] 0.0
          %966 = vst [vmem:[#allocation2 + $0x8] sm:$0xff] 0.0
          %967 = vst [vmem:[#allocation2 + $0x10] sm:$0xff] 0.0
          %968 = vst [vmem:[#allocation2 + $0x18] sm:$0xff] 0.0
          %969 = vst [vmem:[#allocation2 + $0x20] sm:$0xff] 0.0
          %970 = vst [vmem:[#allocation2 + $0x28] sm:$0xff] 0.0
          %971 = vst [vmem:[#allocation2 + $0x30] sm:$0xff] 0.0
          %972 = vst [vmem:[#allocation2 + $0x38] sm:$0xff] 0.0
          %973 = vst [vmem:[#allocation2 + $0x40] sm:$0xff] 0.0
          %974 = vst [vmem:[#allocation2 + $0x48] sm:$0xff] 0.0
          %975 = vst [vmem:[#allocation2 + $0x50] sm:$0xff] 0.0
          %976 = vst [vmem:[#allocation2 + $0x58] sm:$0xff] 0.0
          %977 = vst [vmem:[#allocation2 + $0x60] sm:$0xff] 0.0
          %978 = vst [vmem:[#allocation2 + $0x68] sm:$0xff] 0.0
          %979 = vst [vmem:[#allocation2 + $0x70] sm:$0xff] 0.0
          %980 = vst [vmem:[#allocation2 + $0x78] sm:$0xff] 0.0
        $region82: #{_sae_forward.1} parent=73 // pred_fallthru
          _
        %v981 = vld [vmem:[#allocation3] sm:$0xff]
        %v982 = vld [vmem:[#allocation3 + $0x8] sm:$0xff]
        %v983 = vld [vmem:[#allocation3 + $0x10] sm:$0xff]
        %v984 = vld [vmem:[#allocation3 + $0x18] sm:$0xff]
        %v985 = vld [vmem:[#allocation3 + $0x20] sm:$0xff]
        %v986 = vld [vmem:[#allocation3 + $0x28] sm:$0xff]
        %v987 = vld [vmem:[#allocation3 + $0x30] sm:$0xff]
        %v988 = vld [vmem:[#allocation3 + $0x38] sm:$0xff]
        %v989 = vld [vmem:[%s451] sm:$0xff]
        %v990 = vld [vmem:[%s451 + $0x8] sm:$0xff]
        %v991 = vld [vmem:[%s451 + $0x10] sm:$0xff]
        %v992 = vld [vmem:[%s451 + $0x18] sm:$0xff]
        %v993 = vld [vmem:[%s451 + $0x20] sm:$0xff]
        %v994 = vld [vmem:[%s451 + $0x28] sm:$0xff]
        %v995 = vld [vmem:[%s451 + $0x30] sm:$0xff]
        %v996 = vld [vmem:[%s451 + $0x38] sm:$0xff]
        %v997 = vld [vmem:[%s451 + $0x40] sm:$0xff]
        %v998 = vld [vmem:[%s451 + $0x48] sm:$0xff]
        %v999 = vld [vmem:[%s451 + $0x50] sm:$0xff]
        %v1000 = vld [vmem:[%s451 + $0x58] sm:$0xff]
        %v1001 = vld [vmem:[%s451 + $0x60] sm:$0xff]
        %v1002 = vld [vmem:[%s451 + $0x68] sm:$0xff]
        %v1003 = vld [vmem:[%s451 + $0x70] sm:$0xff]
        %v1004 = vld [vmem:[%s451 + $0x78] sm:$0xff]
        %v1005 = vld [vmem:[%s527] sm:$0x3]
        %v1007 = vlaneseq
        %v1008 = vshrl.u32 %v1007, 7
        %v1009 = vsub.s32 0, %v1008
        %v1010 = vrot.slane %v1005, %v1009
        %v1011 = vlaneseq
        %v1012 = vshrl.u32 %v1011, 7
        %v1013 = vsub.s32 1, %v1012
        %v1014 = vrot.slane %v1005, %v1013
        %v1033 = vunpack.c.l.b16 %v989
        %v1034 = vunpack.c.h.b16 %v989
        %v1035 = vunpack.c.l.b16 %v990
        %v1036 = vunpack.c.h.b16 %v990
        %v1037 = vunpack.c.l.b16 %v991
        %v1038 = vunpack.c.h.b16 %v991
        %v1039 = vunpack.c.l.b16 %v992
        %v1040 = vunpack.c.h.b16 %v992
        %v1041 = vunpack.c.l.b16 %v993
        %v1042 = vunpack.c.h.b16 %v993
        %v1043 = vunpack.c.l.b16 %v994
        %v1044 = vunpack.c.h.b16 %v994
        %v1045 = vunpack.c.l.b16 %v995
        %v1046 = vunpack.c.h.b16 %v995
        %v1047 = vunpack.c.l.b16 %v996
        %v1048 = vunpack.c.h.b16 %v996
        %v1049 = vunpack.c.l.b16 %v997
        %v1050 = vunpack.c.h.b16 %v997
        %v1051 = vunpack.c.l.b16 %v998
        %v1052 = vunpack.c.h.b16 %v998
        %v1053 = vunpack.c.l.b16 %v999
        %v1054 = vunpack.c.h.b16 %v999
        %v1055 = vunpack.c.l.b16 %v1000
        %v1056 = vunpack.c.h.b16 %v1000
        %v1057 = vunpack.c.l.b16 %v1001
        %v1058 = vunpack.c.h.b16 %v1001
        %v1059 = vunpack.c.l.b16 %v1002
        %v1060 = vunpack.c.h.b16 %v1002
        %v1061 = vunpack.c.l.b16 %v1003
        %v1062 = vunpack.c.h.b16 %v1003
        %v1063 = vunpack.c.l.b16 %v1004
        %v1064 = vunpack.c.h.b16 %v1004
        %v1065 = vpack.c.b16 %v1035, %v1033
        %v1066 = vpack.c.b16 %v1036, %v1034
        %v1067 = vpack.c.b16 %v1039, %v1037
        %v1068 = vpack.c.b16 %v1040, %v1038
        %v1069 = vpack.c.b16 %v1043, %v1041
        %v1070 = vpack.c.b16 %v1044, %v1042
        %v1071 = vpack.c.b16 %v1047, %v1045
        %v1072 = vpack.c.b16 %v1048, %v1046
        %v1073 = vpack.c.b16 %v1051, %v1049
        %v1074 = vpack.c.b16 %v1052, %v1050
        %v1075 = vpack.c.b16 %v1055, %v1053
        %v1076 = vpack.c.b16 %v1056, %v1054
        %v1077 = vpack.c.b16 %v1059, %v1057
        %v1078 = vpack.c.b16 %v1060, %v1058
        %v1079 = vpack.c.b16 %v1063, %v1061
        %v1080 = vpack.c.b16 %v1064, %v1062
        %1097 = vmatprep.subr.bf16.mxu0 %v1066
        %1098 = vmatpush1.bf16.msra.mxu0 %v1065
        %1099 = vmatprep.subr.bf16.mxu0 %v1068
        %1100 = vmatpush1.bf16.msra.mxu0 %v1067
        %1101 = vmatprep.subr.bf16.mxu0 %v1070
        %1102 = vmatpush1.bf16.msra.mxu0 %v1069
        %1103 = vmatprep.subr.bf16.mxu0 %v1072
        %1104 = vmatpush1.bf16.msra.mxu0 %v1071
        %1105 = vmatprep.subr.bf16.mxu0 %v1074
        %1106 = vmatpush1.bf16.msra.mxu0 %v1073
        %1107 = vmatprep.subr.bf16.mxu0 %v1076
        %1108 = vmatpush1.bf16.msra.mxu0 %v1075
        %1109 = vmatprep.subr.bf16.mxu0 %v1078
        %1110 = vmatpush1.bf16.msra.mxu0 %v1077
        %1111 = vmatprep.subr.bf16.mxu0 %v1080
        %1112 = vmatpush1.bf16.msra.mxu0 %v1079
        %1113 = vmatprep.subr.bf16.mxu0 0
        %1114 = vmatpush1.bf16.msra.mxu0 0
        %1115 = vmatprep.subr.bf16.mxu0 0
        %1116 = vmatpush1.bf16.msra.mxu0 0
        %1117 = vmatprep.subr.bf16.mxu0 0
        %1118 = vmatpush1.bf16.msra.mxu0 0
        %1119 = vmatprep.subr.bf16.mxu0 0
        %1120 = vmatpush1.bf16.msra.mxu0 0
        %1121 = vmatprep.subr.bf16.mxu0 0
        %1122 = vmatpush1.bf16.msra.mxu0 0
        %1123 = vmatprep.subr.bf16.mxu0 0
        %1124 = vmatpush1.bf16.msra.mxu0 0
        %1125 = vmatprep.subr.bf16.mxu0 0
        %1126 = vmatpush1.bf16.msra.mxu0 0
        %1127 = vmatprep.subr.bf16.mxu0 0
        %1128 = vmatpush1.bf16.msra.mxu0 0
        %1129 = vmatprep.mubr.bf16.mxu0 0
        %1130 = vmatmul.mubr.bf16.gmra.mrb[0].mxu0 %v981
        %v1131 = vpop.f32.mrb[0].mxu0
        %v1132 = vadd.f32 %v1010, %v1131
        %v1133 = vpop.f32.mrb[0].mxu0
        %v1134 = vadd.f32 %v1014, %v1133
        %v1135 = vpop.f32.mrb[0].mxu0
        %v1136 = vadd.f32 %v1010, %v1135
        %v1137 = vpop.f32.mrb[0].mxu0
        %v1138 = vadd.f32 %v1014, %v1137
        %1139 = vmatprep.mubr.bf16.mxu0 0
        %1140 = vmatmul.mubr.bf16.gmra.mrb[0].mxu0 %v982
        %v1141 = vpop.f32.mrb[0].mxu0
        %v1142 = vadd.f32 %v1010, %v1141
        %v1143 = vpop.f32.mrb[0].mxu0
        %v1144 = vadd.f32 %v1014, %v1143
        %v1145 = vpop.f32.mrb[0].mxu0
        %v1146 = vadd.f32 %v1010, %v1145
        %v1147 = vpop.f32.mrb[0].mxu0
        %v1148 = vadd.f32 %v1014, %v1147
        %1149 = vmatprep.mubr.bf16.mxu0 0
        %1150 = vmatmul.mubr.bf16.gmra.mrb[0].mxu0 %v983
        %v1151 = vpop.f32.mrb[0].mxu0
        %v1152 = vadd.f32 %v1010, %v1151
        %v1153 = vpop.f32.mrb[0].mxu0
        %v1154 = vadd.f32 %v1014, %v1153
        %v1155 = vpop.f32.mrb[0].mxu0
        %v1156 = vadd.f32 %v1010, %v1155
        %v1157 = vpop.f32.mrb[0].mxu0
        %v1158 = vadd.f32 %v1014, %v1157
        %1159 = vmatprep.mubr.bf16.mxu0 0
        %1160 = vmatmul.mubr.bf16.gmra.mrb[0].mxu0 %v984
        %v1161 = vpop.f32.mrb[0].mxu0
        %v1162 = vadd.f32 %v1010, %v1161
        %v1163 = vpop.f32.mrb[0].mxu0
        %v1164 = vadd.f32 %v1014, %v1163
        %v1165 = vpop.f32.mrb[0].mxu0
        %v1166 = vadd.f32 %v1010, %v1165
        %v1167 = vpop.f32.mrb[0].mxu0
        %v1168 = vadd.f32 %v1014, %v1167
        %1169 = vmatprep.mubr.bf16.mxu0 0
        %1170 = vmatmul.mubr.bf16.gmra.mrb[0].mxu0 %v985
        %v1171 = vpop.f32.mrb[0].mxu0
        %v1172 = vadd.f32 %v1010, %v1171
        %v1173 = vpop.f32.mrb[0].mxu0
        %v1174 = vadd.f32 %v1014, %v1173
        %v1175 = vpop.f32.mrb[0].mxu0
        %v1176 = vadd.f32 %v1010, %v1175
        %v1177 = vpop.f32.mrb[0].mxu0
        %v1178 = vadd.f32 %v1014, %v1177
        %1179 = vmatprep.mubr.bf16.mxu0 0
        %1180 = vmatmul.mubr.bf16.gmra.mrb[0].mxu0 %v986
        %v1181 = vpop.f32.mrb[0].mxu0
        %v1182 = vadd.f32 %v1010, %v1181
        %v1183 = vpop.f32.mrb[0].mxu0
        %v1184 = vadd.f32 %v1014, %v1183
        %v1185 = vpop.f32.mrb[0].mxu0
        %v1186 = vadd.f32 %v1010, %v1185
        %v1187 = vpop.f32.mrb[0].mxu0
        %v1188 = vadd.f32 %v1014, %v1187
        %1189 = vmatprep.mubr.bf16.mxu0 0
        %1190 = vmatmul.mubr.bf16.gmra.mrb[0].mxu0 %v987
        %v1191 = vpop.f32.mrb[0].mxu0
        %v1192 = vadd.f32 %v1010, %v1191
        %v1193 = vpop.f32.mrb[0].mxu0
        %v1194 = vadd.f32 %v1014, %v1193
        %v1195 = vpop.f32.mrb[0].mxu0
        %v1196 = vadd.f32 %v1010, %v1195
        %v1197 = vpop.f32.mrb[0].mxu0
        %v1198 = vadd.f32 %v1014, %v1197
        %1199 = vmatprep.mubr.bf16.mxu0 0
        %1200 = vmatmul.mubr.bf16.gmra.mrb[0].mxu0 %v988
        %v1201 = vpop.f32.mrb[0].mxu0
        %v1202 = vadd.f32 %v1010, %v1201
        %v1203 = vpop.f32.mrb[0].mxu0
        %v1204 = vadd.f32 %v1014, %v1203
        %v1205 = vpop.f32.mrb[0].mxu0
        %v1206 = vadd.f32 %v1010, %v1205
        %v1207 = vpop.f32.mrb[0].mxu0
        %v1208 = vadd.f32 %v1014, %v1207
        %1209 = vdwg.mxu0
        %v1210 = vmax.f32 %v1132, 0.0
        %v1211 = vmax.f32 %v1134, 0.0
        %v1212 = vmax.f32 %v1136, 0.0
        %v1213 = vmax.f32 %v1138, 0.0
        %v1214 = vmax.f32 %v1142, 0.0
        %v1215 = vmax.f32 %v1144, 0.0
        %v1216 = vmax.f32 %v1146, 0.0
        %v1217 = vmax.f32 %v1148, 0.0
        %v1218 = vmax.f32 %v1152, 0.0
        %v1219 = vmax.f32 %v1154, 0.0
        %v1220 = vmax.f32 %v1156, 0.0
        %v1221 = vmax.f32 %v1158, 0.0
        %v1222 = vmax.f32 %v1162, 0.0
        %v1223 = vmax.f32 %v1164, 0.0
        %v1224 = vmax.f32 %v1166, 0.0
        %v1225 = vmax.f32 %v1168, 0.0
        %v1226 = vmax.f32 %v1172, 0.0
        %v1227 = vmax.f32 %v1174, 0.0
        %v1228 = vmax.f32 %v1176, 0.0
        %v1229 = vmax.f32 %v1178, 0.0
        %v1230 = vmax.f32 %v1182, 0.0
        %v1231 = vmax.f32 %v1184, 0.0
        %v1232 = vmax.f32 %v1186, 0.0
        %v1233 = vmax.f32 %v1188, 0.0
        %v1234 = vmax.f32 %v1192, 0.0
        %v1235 = vmax.f32 %v1194, 0.0
        %v1236 = vmax.f32 %v1196, 0.0
        %v1237 = vmax.f32 %v1198, 0.0
        %v1238 = vmax.f32 %v1202, 0.0
        %v1239 = vmax.f32 %v1204, 0.0
        %v1240 = vmax.f32 %v1206, 0.0
        %v1241 = vmax.f32 %v1208, 0.0
        %v1242 = vpack.c.bf16 %v1212, %v1210
        %v1243 = vpack.c.bf16 %v1213, %v1211
        %v1244 = vpack.c.bf16 %v1216, %v1214
        %v1245 = vpack.c.bf16 %v1217, %v1215
        %v1246 = vpack.c.bf16 %v1220, %v1218
        %v1247 = vpack.c.bf16 %v1221, %v1219
        %v1248 = vpack.c.bf16 %v1224, %v1222
        %v1249 = vpack.c.bf16 %v1225, %v1223
        %v1250 = vpack.c.bf16 %v1228, %v1226
        %v1251 = vpack.c.bf16 %v1229, %v1227
        %v1252 = vpack.c.bf16 %v1232, %v1230
        %v1253 = vpack.c.bf16 %v1233, %v1231
        %v1254 = vpack.c.bf16 %v1236, %v1234
        %v1255 = vpack.c.bf16 %v1237, %v1235
        %v1256 = vpack.c.bf16 %v1240, %v1238
        %v1257 = vpack.c.bf16 %v1241, %v1239
        %v1274 = vunpack.c.l.b16 %v1242
        %v1275 = vunpack.c.l.b16 %v1243
        %v1276 = vunpack.c.h.b16 %v1242
        %v1277 = vunpack.c.h.b16 %v1243
        %v1278 = vunpack.c.l.b16 %v1244
        %v1279 = vunpack.c.l.b16 %v1245
        %v1280 = vunpack.c.h.b16 %v1244
        %v1281 = vunpack.c.h.b16 %v1245
        %v1282 = vunpack.c.l.b16 %v1246
        %v1283 = vunpack.c.l.b16 %v1247
        %v1284 = vunpack.c.h.b16 %v1246
        %v1285 = vunpack.c.h.b16 %v1247
        %v1286 = vunpack.c.l.b16 %v1248
        %v1287 = vunpack.c.l.b16 %v1249
        %v1288 = vunpack.c.h.b16 %v1248
        %v1289 = vunpack.c.h.b16 %v1249
        %v1290 = vunpack.c.l.b16 %v1250
        %v1291 = vunpack.c.l.b16 %v1251
        %v1292 = vunpack.c.h.b16 %v1250
        %v1293 = vunpack.c.h.b16 %v1251
        %v1294 = vunpack.c.l.b16 %v1252
        %v1295 = vunpack.c.l.b16 %v1253
        %v1296 = vunpack.c.h.b16 %v1252
        %v1297 = vunpack.c.h.b16 %v1253
        %v1298 = vunpack.c.l.b16 %v1254
        %v1299 = vunpack.c.l.b16 %v1255
        %v1300 = vunpack.c.h.b16 %v1254
        %v1301 = vunpack.c.h.b16 %v1255
        %v1302 = vunpack.c.l.b16 %v1256
        %v1303 = vunpack.c.l.b16 %v1257
        %v1304 = vunpack.c.h.b16 %v1256
        %v1305 = vunpack.c.h.b16 %v1257
        %v1306 = vpack.c.b16 %v1275, %v1274
        %v1307 = vpack.c.b16 %v1277, %v1276
        %v1308 = vpack.c.b16 %v1279, %v1278
        %v1309 = vpack.c.b16 %v1281, %v1280
        %v1310 = vpack.c.b16 %v1283, %v1282
        %v1311 = vpack.c.b16 %v1285, %v1284
        %v1312 = vpack.c.b16 %v1287, %v1286
        %v1313 = vpack.c.b16 %v1289, %v1288
        %v1314 = vpack.c.b16 %v1291, %v1290
        %v1315 = vpack.c.b16 %v1293, %v1292
        %v1316 = vpack.c.b16 %v1295, %v1294
        %v1317 = vpack.c.b16 %v1297, %v1296
        %v1318 = vpack.c.b16 %v1299, %v1298
        %v1319 = vpack.c.b16 %v1301, %v1300
        %v1320 = vpack.c.b16 %v1303, %v1302
        %v1321 = vpack.c.b16 %v1305, %v1304
        %1338 = vst [vmem:[%s495] sm:$0xff] %v1306
        %1339 = vst [vmem:[%s495 + $0x8] sm:$0xff] %v1307
        %1340 = vst [vmem:[%s495 + $0x10] sm:$0xff] %v1308
        %1341 = vst [vmem:[%s495 + $0x18] sm:$0xff] %v1309
        %1342 = vst [vmem:[%s495 + $0x20] sm:$0xff] %v1310
        %1343 = vst [vmem:[%s495 + $0x28] sm:$0xff] %v1311
        %1344 = vst [vmem:[%s495 + $0x30] sm:$0xff] %v1312
        %1345 = vst [vmem:[%s495 + $0x38] sm:$0xff] %v1313
        %1346 = vst [vmem:[%s495 + $0x40] sm:$0xff] %v1314
        %1347 = vst [vmem:[%s495 + $0x48] sm:$0xff] %v1315
        %1348 = vst [vmem:[%s495 + $0x50] sm:$0xff] %v1316
        %1349 = vst [vmem:[%s495 + $0x58] sm:$0xff] %v1317
        %1350 = vst [vmem:[%s495 + $0x60] sm:$0xff] %v1318
        %1351 = vst [vmem:[%s495 + $0x68] sm:$0xff] %v1319
        %1352 = vst [vmem:[%s495 + $0x70] sm:$0xff] %v1320
        %1353 = vst [vmem:[%s495 + $0x78] sm:$0xff] %v1321
        %v1354 = vld [vmem:[#allocation2] sm:$0xff]
        %v1355 = vld [vmem:[#allocation2 + $0x8] sm:$0xff]
        %v1356 = vld [vmem:[#allocation2 + $0x10] sm:$0xff]
        %v1357 = vld [vmem:[#allocation2 + $0x18] sm:$0xff]
        %v1358 = vld [vmem:[#allocation2 + $0x20] sm:$0xff]
        %v1359 = vld [vmem:[#allocation2 + $0x28] sm:$0xff]
        %v1360 = vld [vmem:[#allocation2 + $0x30] sm:$0xff]
        %v1361 = vld [vmem:[#allocation2 + $0x38] sm:$0xff]
        %v1362 = vld [vmem:[#allocation2 + $0x40] sm:$0xff]
        %v1363 = vld [vmem:[#allocation2 + $0x48] sm:$0xff]
        %v1364 = vld [vmem:[#allocation2 + $0x50] sm:$0xff]
        %v1365 = vld [vmem:[#allocation2 + $0x58] sm:$0xff]
        %v1366 = vld [vmem:[#allocation2 + $0x60] sm:$0xff]
        %v1367 = vld [vmem:[#allocation2 + $0x68] sm:$0xff]
        %v1368 = vld [vmem:[#allocation2 + $0x70] sm:$0xff]
        %v1369 = vld [vmem:[#allocation2 + $0x78] sm:$0xff]
        %v1370 = vld [vmem:[%s533] sm:$0xf]
        %v1371 = vld [vmem:[%s533 + $0x4] sm:$0xf]
        %v1372 = vld [vmem:[%s533 + $0x8] sm:$0xf]
        %v1373 = vld [vmem:[%s533 + $0xc] sm:$0xf]
        %v1374 = vld [vmem:[%s533 + $0x10] sm:$0xf]
        %v1375 = vld [vmem:[%s533 + $0x14] sm:$0xf]
        %v1376 = vld [vmem:[%s533 + $0x18] sm:$0xf]
        %v1377 = vld [vmem:[%s533 + $0x1c] sm:$0xf]
        %v1378 = vld [vmem:[%s533 + $0x20] sm:$0xf]
        %v1379 = vld [vmem:[%s533 + $0x24] sm:$0xf]
        %v1380 = vld [vmem:[%s533 + $0x28] sm:$0xf]
        %v1381 = vld [vmem:[%s533 + $0x2c] sm:$0xf]
        %v1382 = vld [vmem:[%s533 + $0x30] sm:$0xf]
        %v1383 = vld [vmem:[%s533 + $0x34] sm:$0xf]
        %v1384 = vld [vmem:[%s533 + $0x38] sm:$0xf]
        %v1385 = vld [vmem:[%s533 + $0x3c] sm:$0xf]
        %v1386 = vld [vmem:[%s533 + $0x40] sm:$0xf]
        %v1387 = vld [vmem:[%s533 + $0x44] sm:$0xf]
        %v1388 = vld [vmem:[%s533 + $0x48] sm:$0xf]
        %v1389 = vld [vmem:[%s533 + $0x4c] sm:$0xf]
        %v1390 = vld [vmem:[%s533 + $0x50] sm:$0xf]
        %v1391 = vld [vmem:[%s533 + $0x54] sm:$0xf]
        %v1392 = vld [vmem:[%s533 + $0x58] sm:$0xf]
        %v1393 = vld [vmem:[%s533 + $0x5c] sm:$0xf]
        %v1394 = vld [vmem:[%s533 + $0x60] sm:$0xf]
        %v1395 = vld [vmem:[%s533 + $0x64] sm:$0xf]
        %v1396 = vld [vmem:[%s533 + $0x68] sm:$0xf]
        %v1397 = vld [vmem:[%s533 + $0x6c] sm:$0xf]
        %v1398 = vld [vmem:[%s533 + $0x70] sm:$0xf]
        %v1399 = vld [vmem:[%s533 + $0x74] sm:$0xf]
        %v1400 = vld [vmem:[%s533 + $0x78] sm:$0xf]
        %v1401 = vld [vmem:[%s533 + $0x7c] sm:$0xf]
        %v1434 = vunpack.c.l.b16 %v1370
        %v1435 = vunpack.c.l.b16 %v1371
        %v1436 = vunpack.c.l.b16 %v1372
        %v1437 = vunpack.c.l.b16 %v1373
        %v1438 = vunpack.c.l.b16 %v1374
        %v1439 = vunpack.c.l.b16 %v1375
        %v1440 = vunpack.c.l.b16 %v1376
        %v1441 = vunpack.c.l.b16 %v1377
        %v1442 = vunpack.c.l.b16 %v1378
        %v1443 = vunpack.c.l.b16 %v1379
        %v1444 = vunpack.c.l.b16 %v1380
        %v1445 = vunpack.c.l.b16 %v1381
        %v1446 = vunpack.c.l.b16 %v1382
        %v1447 = vunpack.c.l.b16 %v1383
        %v1448 = vunpack.c.l.b16 %v1384
        %v1449 = vunpack.c.l.b16 %v1385
        %v1450 = vunpack.c.l.b16 %v1386
        %v1451 = vunpack.c.l.b16 %v1387
        %v1452 = vunpack.c.l.b16 %v1388
        %v1453 = vunpack.c.l.b16 %v1389
        %v1454 = vunpack.c.l.b16 %v1390
        %v1455 = vunpack.c.l.b16 %v1391
        %v1456 = vunpack.c.l.b16 %v1392
        %v1457 = vunpack.c.l.b16 %v1393
        %v1458 = vunpack.c.l.b16 %v1394
        %v1459 = vunpack.c.l.b16 %v1395
        %v1460 = vunpack.c.l.b16 %v1396
        %v1461 = vunpack.c.l.b16 %v1397
        %v1462 = vunpack.c.l.b16 %v1398
        %v1463 = vunpack.c.l.b16 %v1399
        %v1464 = vunpack.c.l.b16 %v1400
        %v1465 = vunpack.c.l.b16 %v1401
        %v1466 = vpack.c.b16 %v1435, %v1434
        %v1467 = vpack.c.b16 %v1437, %v1436
        %v1468 = vpack.c.b16 %v1439, %v1438
        %v1469 = vpack.c.b16 %v1441, %v1440
        %v1470 = vpack.c.b16 %v1443, %v1442
        %v1471 = vpack.c.b16 %v1445, %v1444
        %v1472 = vpack.c.b16 %v1447, %v1446
        %v1473 = vpack.c.b16 %v1449, %v1448
        %v1474 = vpack.c.b16 %v1451, %v1450
        %v1475 = vpack.c.b16 %v1453, %v1452
        %v1476 = vpack.c.b16 %v1455, %v1454
        %v1477 = vpack.c.b16 %v1457, %v1456
        %v1478 = vpack.c.b16 %v1459, %v1458
        %v1479 = vpack.c.b16 %v1461, %v1460
        %v1480 = vpack.c.b16 %v1463, %v1462
        %v1481 = vpack.c.b16 %v1465, %v1464
        %1498 = vmatprep.subr.bf16.mxu0 0
        %1499 = vmatpush1.bf16.msra.mxu0 %v1466
        %1500 = vmatprep.subr.bf16.mxu0 0
        %1501 = vmatpush1.bf16.msra.mxu0 %v1467
        %1502 = vmatprep.subr.bf16.mxu0 0
        %1503 = vmatpush1.bf16.msra.mxu0 %v1468
        %1504 = vmatprep.subr.bf16.mxu0 0
        %1505 = vmatpush1.bf16.msra.mxu0 %v1469
        %1506 = vmatprep.subr.bf16.mxu0 0
        %1507 = vmatpush1.bf16.msra.mxu0 %v1470
        %1508 = vmatprep.subr.bf16.mxu0 0
        %1509 = vmatpush1.bf16.msra.mxu0 %v1471
        %1510 = vmatprep.subr.bf16.mxu0 0
        %1511 = vmatpush1.bf16.msra.mxu0 %v1472
        %1512 = vmatprep.subr.bf16.mxu0 0
        %1513 = vmatpush1.bf16.msra.mxu0 %v1473
        %1514 = vmatprep.subr.bf16.mxu0 0
        %1515 = vmatpush1.bf16.msra.mxu0 %v1474
        %1516 = vmatprep.subr.bf16.mxu0 0
        %1517 = vmatpush1.bf16.msra.mxu0 %v1475
        %1518 = vmatprep.subr.bf16.mxu0 0
        %1519 = vmatpush1.bf16.msra.mxu0 %v1476
        %1520 = vmatprep.subr.bf16.mxu0 0
        %1521 = vmatpush1.bf16.msra.mxu0 %v1477
        %1522 = vmatprep.subr.bf16.mxu0 0
        %1523 = vmatpush1.bf16.msra.mxu0 %v1478
        %1524 = vmatprep.subr.bf16.mxu0 0
        %1525 = vmatpush1.bf16.msra.mxu0 %v1479
        %1526 = vmatprep.subr.bf16.mxu0 0
        %1527 = vmatpush1.bf16.msra.mxu0 %v1480
        %1528 = vmatprep.subr.bf16.mxu0 0
        %1529 = vmatpush1.bf16.msra.mxu0 %v1481
        %1530 = vmatprep.mubr.bf16.mxu0 %v1243
        %1531 = vmatmul.mubr.bf16.gmra.mrb[0].mxu0 %v1242
        %v1532 = vpop.f32.mrb[0].mxu0
        %v1533 = vadd.f32 0.0, %v1532
        %v1534 = vpop.f32.mrb[0].mxu0
        %v1535 = vpop.f32.mrb[0].mxu0
        %v1536 = vadd.f32 0.0, %v1535
        %v1537 = vpop.f32.mrb[0].mxu0
        %1538 = vmatprep.mubr.bf16.mxu0 %v1245
        %1539 = vmatmul.mubr.bf16.gmra.mrb[0].mxu0 %v1244
        %v1540 = vpop.f32.mrb[0].mxu0
        %v1541 = vadd.f32 0.0, %v1540
        %v1542 = vpop.f32.mrb[0].mxu0
        %v1543 = vpop.f32.mrb[0].mxu0
        %v1544 = vadd.f32 0.0, %v1543
        %v1545 = vpop.f32.mrb[0].mxu0
        %1546 = vmatprep.mubr.bf16.mxu0 %v1247
        %1547 = vmatmul.mubr.bf16.gmra.mrb[0].mxu0 %v1246
        %v1548 = vpop.f32.mrb[0].mxu0
        %v1549 = vadd.f32 0.0, %v1548
        %v1550 = vpop.f32.mrb[0].mxu0
        %v1551 = vpop.f32.mrb[0].mxu0
        %v1552 = vadd.f32 0.0, %v1551
        %v1553 = vpop.f32.mrb[0].mxu0
        %1554 = vmatprep.mubr.bf16.mxu0 %v1249
        %1555 = vmatmul.mubr.bf16.gmra.mrb[0].mxu0 %v1248
        %v1556 = vpop.f32.mrb[0].mxu0
        %v1557 = vadd.f32 0.0, %v1556
        %v1558 = vpop.f32.mrb[0].mxu0
        %v1559 = vpop.f32.mrb[0].mxu0
        %v1560 = vadd.f32 0.0, %v1559
        %v1561 = vpop.f32.mrb[0].mxu0
        %1562 = vmatprep.mubr.bf16.mxu0 %v1251
        %1563 = vmatmul.mubr.bf16.gmra.mrb[0].mxu0 %v1250
        %v1564 = vpop.f32.mrb[0].mxu0
        %v1565 = vadd.f32 0.0, %v1564
        %v1566 = vpop.f32.mrb[0].mxu0
        %v1567 = vpop.f32.mrb[0].mxu0
        %v1568 = vadd.f32 0.0, %v1567
        %v1569 = vpop.f32.mrb[0].mxu0
        %1570 = vmatprep.mubr.bf16.mxu0 %v1253
        %1571 = vmatmul.mubr.bf16.gmra.mrb[0].mxu0 %v1252
        %v1572 = vpop.f32.mrb[0].mxu0
        %v1573 = vadd.f32 0.0, %v1572
        %v1574 = vpop.f32.mrb[0].mxu0
        %v1575 = vpop.f32.mrb[0].mxu0
        %v1576 = vadd.f32 0.0, %v1575
        %v1577 = vpop.f32.mrb[0].mxu0
        %1578 = vmatprep.mubr.bf16.mxu0 %v1255
        %1579 = vmatmul.mubr.bf16.gmra.mrb[0].mxu0 %v1254
        %v1580 = vpop.f32.mrb[0].mxu0
        %v1581 = vadd.f32 0.0, %v1580
        %v1582 = vpop.f32.mrb[0].mxu0
        %v1583 = vpop.f32.mrb[0].mxu0
        %v1584 = vadd.f32 0.0, %v1583
        %v1585 = vpop.f32.mrb[0].mxu0
        %1586 = vmatprep.mubr.bf16.mxu0 %v1257
        %1587 = vmatmul.mubr.bf16.gmra.mrb[0].mxu0 %v1256
        %v1588 = vpop.f32.mrb[0].mxu0
        %v1589 = vadd.f32 0.0, %v1588
        %v1590 = vpop.f32.mrb[0].mxu0
        %v1591 = vpop.f32.mrb[0].mxu0
        %v1592 = vadd.f32 0.0, %v1591
        %v1593 = vpop.f32.mrb[0].mxu0
        %1594 = vdwg.mxu0
        %v1595 = vadd.f32 %v1354, %v1533
        %v1596 = vadd.f32 %v1355, %v1536
        %v1597 = vadd.f32 %v1356, %v1541
        %v1598 = vadd.f32 %v1357, %v1544
        %v1599 = vadd.f32 %v1358, %v1549
        %v1600 = vadd.f32 %v1359, %v1552
        %v1601 = vadd.f32 %v1360, %v1557
        %v1602 = vadd.f32 %v1361, %v1560
        %v1603 = vadd.f32 %v1362, %v1565
        %v1604 = vadd.f32 %v1363, %v1568
        %v1605 = vadd.f32 %v1364, %v1573
        %v1606 = vadd.f32 %v1365, %v1576
        %v1607 = vadd.f32 %v1366, %v1581
        %v1608 = vadd.f32 %v1367, %v1584
        %v1609 = vadd.f32 %v1368, %v1589
        %v1610 = vadd.f32 %v1369, %v1592
        %1611 = vst [vmem:[#allocation2] sm:$0xff] %v1595
        %1612 = vst [vmem:[#allocation2 + $0x8] sm:$0xff] %v1596
        %1613 = vst [vmem:[#allocation2 + $0x10] sm:$0xff] %v1597
        %1614 = vst [vmem:[#allocation2 + $0x18] sm:$0xff] %v1598
        %1615 = vst [vmem:[#allocation2 + $0x20] sm:$0xff] %v1599
        %1616 = vst [vmem:[#allocation2 + $0x28] sm:$0xff] %v1600
        %1617 = vst [vmem:[#allocation2 + $0x30] sm:$0xff] %v1601
        %1618 = vst [vmem:[#allocation2 + $0x38] sm:$0xff] %v1602
        %1619 = vst [vmem:[#allocation2 + $0x40] sm:$0xff] %v1603
        %1620 = vst [vmem:[#allocation2 + $0x48] sm:$0xff] %v1604
        %1621 = vst [vmem:[#allocation2 + $0x50] sm:$0xff] %v1605
        %1622 = vst [vmem:[#allocation2 + $0x58] sm:$0xff] %v1606
        %1623 = vst [vmem:[#allocation2 + $0x60] sm:$0xff] %v1607
        %1624 = vst [vmem:[#allocation2 + $0x68] sm:$0xff] %v1608
        %1625 = vst [vmem:[#allocation2 + $0x70] sm:$0xff] %v1609
        %1626 = vst [vmem:[#allocation2 + $0x78] sm:$0xff] %v1610
        %p1627 = scmp.eq.s32.totalorder %s32, 1
        // Predicated region
        $region83: #{_sae_forward.1} parent=73 // pred_check
          %p1628 = pneg %p1627
        $region84: #{_sae_forward.1} parent=73 // pred_check_branch
          %1630 = sbr.rel (%p1628) target = $region86
        $region85: #{_sae_forward.1} parent=73 // pred_region
          %v1631 = vld [vmem:[#allocation2] sm:$0xff]
          %v1632 = vld [vmem:[#allocation2 + $0x8] sm:$0xff]
          %v1633 = vld [vmem:[#allocation2 + $0x10] sm:$0xff]
          %v1634 = vld [vmem:[#allocation2 + $0x18] sm:$0xff]
          %v1635 = vld [vmem:[#allocation2 + $0x20] sm:$0xff]
          %v1636 = vld [vmem:[#allocation2 + $0x28] sm:$0xff]
          %v1637 = vld [vmem:[#allocation2 + $0x30] sm:$0xff]
          %v1638 = vld [vmem:[#allocation2 + $0x38] sm:$0xff]
          %v1639 = vld [vmem:[#allocation2 + $0x40] sm:$0xff]
          %v1640 = vld [vmem:[#allocation2 + $0x48] sm:$0xff]
          %v1641 = vld [vmem:[#allocation2 + $0x50] sm:$0xff]
          %v1642 = vld [vmem:[#allocation2 + $0x58] sm:$0xff]
          %v1643 = vld [vmem:[#allocation2 + $0x60] sm:$0xff]
          %v1644 = vld [vmem:[#allocation2 + $0x68] sm:$0xff]
          %v1645 = vld [vmem:[#allocation2 + $0x70] sm:$0xff]
          %v1646 = vld [vmem:[#allocation2 + $0x78] sm:$0xff]
          %v1647 = vld [vmem:[%s4] sm:$0x1]
          %v1649 = vlaneseq
          %v1650 = vshrl.u32 %v1649, 7
          %v1651 = vsub.s32 0, %v1650
          %v1652 = vrot.slane %v1647, %v1651
          %v1654 = vadd.f32 %v1631, %v1652
          %v1655 = vadd.f32 %v1632, %v1652
          %v1656 = vadd.f32 %v1633, %v1652
          %v1657 = vadd.f32 %v1634, %v1652
          %v1658 = vadd.f32 %v1635, %v1652
          %v1659 = vadd.f32 %v1636, %v1652
          %v1660 = vadd.f32 %v1637, %v1652
          %v1661 = vadd.f32 %v1638, %v1652
          %v1662 = vadd.f32 %v1639, %v1652
          %v1663 = vadd.f32 %v1640, %v1652
          %v1664 = vadd.f32 %v1641, %v1652
          %v1665 = vadd.f32 %v1642, %v1652
          %v1666 = vadd.f32 %v1643, %v1652
          %v1667 = vadd.f32 %v1644, %v1652
          %v1668 = vadd.f32 %v1645, %v1652
          %v1669 = vadd.f32 %v1646, %v1652
          %v1670 = vld [vmem:[%s542] sm:$0xff]
          %v1671 = vld [vmem:[%s542 + $0x8] sm:$0xff]
          %v1672 = vld [vmem:[%s542 + $0x10] sm:$0xff]
          %v1673 = vld [vmem:[%s542 + $0x18] sm:$0xff]
          %v1674 = vld [vmem:[%s542 + $0x20] sm:$0xff]
          %v1675 = vld [vmem:[%s542 + $0x28] sm:$0xff]
          %v1676 = vld [vmem:[%s542 + $0x30] sm:$0xff]
          %v1677 = vld [vmem:[%s542 + $0x38] sm:$0xff]
          %v1678 = vld [vmem:[%s542 + $0x40] sm:$0xff]
          %v1679 = vld [vmem:[%s542 + $0x48] sm:$0xff]
          %v1680 = vld [vmem:[%s542 + $0x50] sm:$0xff]
          %v1681 = vld [vmem:[%s542 + $0x58] sm:$0xff]
          %v1682 = vld [vmem:[%s542 + $0x60] sm:$0xff]
          %v1683 = vld [vmem:[%s542 + $0x68] sm:$0xff]
          %v1684 = vld [vmem:[%s542 + $0x70] sm:$0xff]
          %v1685 = vld [vmem:[%s542 + $0x78] sm:$0xff]
          %v1686 = vld [vmem:[%s548] sm:$0xff]
          %v1687 = vld [vmem:[%s548 + $0x8] sm:$0xff]
          %v1688 = vld [vmem:[%s548 + $0x10] sm:$0xff]
          %v1689 = vld [vmem:[%s548 + $0x18] sm:$0xff]
          %v1690 = vld [vmem:[%s548 + $0x20] sm:$0xff]
          %v1691 = vld [vmem:[%s548 + $0x28] sm:$0xff]
          %v1692 = vld [vmem:[%s548 + $0x30] sm:$0xff]
          %v1693 = vld [vmem:[%s548 + $0x38] sm:$0xff]
          %v1694 = vld [vmem:[%s548 + $0x40] sm:$0xff]
          %v1695 = vld [vmem:[%s548 + $0x48] sm:$0xff]
          %v1696 = vld [vmem:[%s548 + $0x50] sm:$0xff]
          %v1697 = vld [vmem:[%s548 + $0x58] sm:$0xff]
          %v1698 = vld [vmem:[%s548 + $0x60] sm:$0xff]
          %v1699 = vld [vmem:[%s548 + $0x68] sm:$0xff]
          %v1700 = vld [vmem:[%s548 + $0x70] sm:$0xff]
          %v1701 = vld [vmem:[%s548 + $0x78] sm:$0xff]
          %1703 = vset.pattern.permute.xlu0 0
          %1704 = vperm.xlu0 %1703, %v1686
          %v1705 = vpop.permute.xlu0 %1704
          %1708 = vset.pattern.permute.xlu0 0
          %1709 = vperm.xlu0 %1708, %v1687
          %v1710 = vpop.permute.xlu0 %1709
          %1713 = vset.pattern.permute.xlu0 0
          %1714 = vperm.xlu0 %1713, %v1688
          %v1715 = vpop.permute.xlu0 %1714
          %1718 = vset.pattern.permute.xlu0 0
          %1719 = vperm.xlu0 %1718, %v1689
          %v1720 = vpop.permute.xlu0 %1719
          %1723 = vset.pattern.permute.xlu0 0
          %1724 = vperm.xlu0 %1723, %v1690
          %v1725 = vpop.permute.xlu0 %1724
          %1728 = vset.pattern.permute.xlu0 0
          %1729 = vperm.xlu0 %1728, %v1691
          %v1730 = vpop.permute.xlu0 %1729
          %1733 = vset.pattern.permute.xlu0 0
          %1734 = vperm.xlu0 %1733, %v1692
          %v1735 = vpop.permute.xlu0 %1734
          %1738 = vset.pattern.permute.xlu0 0
          %1739 = vperm.xlu0 %1738, %v1693
          %v1740 = vpop.permute.xlu0 %1739
          %1743 = vset.pattern.permute.xlu0 0
          %1744 = vperm.xlu0 %1743, %v1694
          %v1745 = vpop.permute.xlu0 %1744
          %1748 = vset.pattern.permute.xlu0 0
          %1749 = vperm.xlu0 %1748, %v1695
          %v1750 = vpop.permute.xlu0 %1749
          %1753 = vset.pattern.permute.xlu0 0
          %1754 = vperm.xlu0 %1753, %v1696
          %v1755 = vpop.permute.xlu0 %1754
          %1758 = vset.pattern.permute.xlu0 0
          %1759 = vperm.xlu0 %1758, %v1697
          %v1760 = vpop.permute.xlu0 %1759
          %1763 = vset.pattern.permute.xlu0 0
          %1764 = vperm.xlu0 %1763, %v1698
          %v1765 = vpop.permute.xlu0 %1764
          %1768 = vset.pattern.permute.xlu0 0
          %1769 = vperm.xlu0 %1768, %v1699
          %v1770 = vpop.permute.xlu0 %1769
          %1773 = vset.pattern.permute.xlu0 0
          %1774 = vperm.xlu0 %1773, %v1700
          %v1775 = vpop.permute.xlu0 %1774
          %1778 = vset.pattern.permute.xlu0 0
          %1779 = vperm.xlu0 %1778, %v1701
          %v1780 = vpop.permute.xlu0 %1779
          %v1782 = vmul.f32 %v1654, %v1705
          %v1783 = vmul.f32 %v1655, %v1710
          %v1784 = vmul.f32 %v1656, %v1715
          %v1785 = vmul.f32 %v1657, %v1720
          %v1786 = vmul.f32 %v1658, %v1725
          %v1787 = vmul.f32 %v1659, %v1730
          %v1788 = vmul.f32 %v1660, %v1735
          %v1789 = vmul.f32 %v1661, %v1740
          %v1790 = vmul.f32 %v1662, %v1745
          %v1791 = vmul.f32 %v1663, %v1750
          %v1792 = vmul.f32 %v1664, %v1755
          %v1793 = vmul.f32 %v1665, %v1760
          %v1794 = vmul.f32 %v1666, %v1765
          %v1795 = vmul.f32 %v1667, %v1770
          %v1796 = vmul.f32 %v1668, %v1775
          %v1797 = vmul.f32 %v1669, %v1780
          %1799 = vset.pattern.permute.xlu0 0
          %1800 = vperm.xlu0 %1799, %v1670
          %v1801 = vpop.permute.xlu0 %1800
          %1804 = vset.pattern.permute.xlu0 0
          %1805 = vperm.xlu0 %1804, %v1671
          %v1806 = vpop.permute.xlu0 %1805
          %1809 = vset.pattern.permute.xlu0 0
          %1810 = vperm.xlu0 %1809, %v1672
          %v1811 = vpop.permute.xlu0 %1810
          %1814 = vset.pattern.permute.xlu0 0
          %1815 = vperm.xlu0 %1814, %v1673
          %v1816 = vpop.permute.xlu0 %1815
          %1819 = vset.pattern.permute.xlu0 0
          %1820 = vperm.xlu0 %1819, %v1674
          %v1821 = vpop.permute.xlu0 %1820
          %1824 = vset.pattern.permute.xlu0 0
          %1825 = vperm.xlu0 %1824, %v1675
          %v1826 = vpop.permute.xlu0 %1825
          %1829 = vset.pattern.permute.xlu0 0
          %1830 = vperm.xlu0 %1829, %v1676
          %v1831 = vpop.permute.xlu0 %1830
          %1834 = vset.pattern.permute.xlu0 0
          %1835 = vperm.xlu0 %1834, %v1677
          %v1836 = vpop.permute.xlu0 %1835
          %1839 = vset.pattern.permute.xlu0 0
          %1840 = vperm.xlu0 %1839, %v1678
          %v1841 = vpop.permute.xlu0 %1840
          %1844 = vset.pattern.permute.xlu0 0
          %1845 = vperm.xlu0 %1844, %v1679
          %v1846 = vpop.permute.xlu0 %1845
          %1849 = vset.pattern.permute.xlu0 0
          %1850 = vperm.xlu0 %1849, %v1680
          %v1851 = vpop.permute.xlu0 %1850
          %1854 = vset.pattern.permute.xlu0 0
          %1855 = vperm.xlu0 %1854, %v1681
          %v1856 = vpop.permute.xlu0 %1855
          %1859 = vset.pattern.permute.xlu0 0
          %1860 = vperm.xlu0 %1859, %v1682
          %v1861 = vpop.permute.xlu0 %1860
          %1864 = vset.pattern.permute.xlu0 0
          %1865 = vperm.xlu0 %1864, %v1683
          %v1866 = vpop.permute.xlu0 %1865
          %1869 = vset.pattern.permute.xlu0 0
          %1870 = vperm.xlu0 %1869, %v1684
          %v1871 = vpop.permute.xlu0 %1870
          %1874 = vset.pattern.permute.xlu0 0
          %1875 = vperm.xlu0 %1874, %v1685
          %v1876 = vpop.permute.xlu0 %1875
          %v1878 = vadd.f32 %v1801, %v1782
          %v1879 = vadd.f32 %v1806, %v1783
          %v1880 = vadd.f32 %v1811, %v1784
          %v1881 = vadd.f32 %v1816, %v1785
          %v1882 = vadd.f32 %v1821, %v1786
          %v1883 = vadd.f32 %v1826, %v1787
          %v1884 = vadd.f32 %v1831, %v1788
          %v1885 = vadd.f32 %v1836, %v1789
          %v1886 = vadd.f32 %v1841, %v1790
          %v1887 = vadd.f32 %v1846, %v1791
          %v1888 = vadd.f32 %v1851, %v1792
          %v1889 = vadd.f32 %v1856, %v1793
          %v1890 = vadd.f32 %v1861, %v1794
          %v1891 = vadd.f32 %v1866, %v1795
          %v1892 = vadd.f32 %v1871, %v1796
          %v1893 = vadd.f32 %v1876, %v1797
          %1894 = vst [vmem:[%s489] sm:$0xff] %v1878
          %1895 = vst [vmem:[%s489 + $0x8] sm:$0xff] %v1879
          %1896 = vst [vmem:[%s489 + $0x10] sm:$0xff] %v1880
          %1897 = vst [vmem:[%s489 + $0x18] sm:$0xff] %v1881
          %1898 = vst [vmem:[%s489 + $0x20] sm:$0xff] %v1882
          %1899 = vst [vmem:[%s489 + $0x28] sm:$0xff] %v1883
          %1900 = vst [vmem:[%s489 + $0x30] sm:$0xff] %v1884
          %1901 = vst [vmem:[%s489 + $0x38] sm:$0xff] %v1885
          %1902 = vst [vmem:[%s489 + $0x40] sm:$0xff] %v1886
          %1903 = vst [vmem:[%s489 + $0x48] sm:$0xff] %v1887
          %1904 = vst [vmem:[%s489 + $0x50] sm:$0xff] %v1888
          %1905 = vst [vmem:[%s489 + $0x58] sm:$0xff] %v1889
          %1906 = vst [vmem:[%s489 + $0x60] sm:$0xff] %v1890
          %1907 = vst [vmem:[%s489 + $0x68] sm:$0xff] %v1891
          %1908 = vst [vmem:[%s489 + $0x70] sm:$0xff] %v1892
          %1909 = vst [vmem:[%s489 + $0x78] sm:$0xff] %v1893
        $region86: #{_sae_forward.1} parent=73 // pred_fallthru
          _
        %s1910 = sand.u32 %s172, 1
        %s1911 = scalar_lea.sflag [#allocation6], %s1910
        %s1912 = sand.u32 %s172, 1
        %s1913 = smul.addr %s1912, 128
        %s1914 = scalar_lea.vmem [#allocation5], %s1913
        %s1915 = sand.u32 %s200, 1
        %s1916 = sand.u32 %s200, 1
        %s1917 = smul.addr %s1916, 128
        %s1918 = scalar_lea.vmem [#allocation7], %s1917
        %s1919 = smul.u32 16, %s31
        %p1920 = scmp.lt.s32.totalorder %s1919, 31
        %s1921 = scalar_select %p1920, %s1919, 31
        %s1922 = smul.addr %s1921, 8
        %s1923 = scalar_lea.vmem %s7, %s1922
        %s1924 = smul.u32 16, %s31
        %p1925 = scmp.lt.s32.totalorder %s1924, 31
        %s1926 = scalar_select %p1925, %s1924, 31
        %s1927 = smul.addr %s1926, 8
        %s1928 = scalar_lea.vmem %s8, %s1927
        %s1929 = sand.u32 %s278, 1
        %s1930 = scalar_lea.sflag [#allocation9], %s1929
        %s1931 = sand.u32 %s278, 1
        %s1932 = smul.addr %s1931, 128
        %s1933 = scalar_lea.vmem [#allocation8], %s1932
        // Predicated region
        $region87: #{_sae_forward.1} parent=73 // pred_check
          %p1934 = pneg %p182
        $region88: #{_sae_forward.1} parent=73 // pred_check_branch
          %1936 = sbr.rel (%p1934) target = $region90
        $region89: #{_sae_forward.1} parent=73 // pred_region
          %s1937 = smul.u32 16, %s31
          %s1939 = ssub.s32 2048, 2048
          %1940 = vsyncadd %s1911, %s1939
          %s1941 = smul.addr %s1937, 128
          %s1942 = scalar_lea.hbm %s5, %s1941
          %s1943 = sshll.u32 %s1914, 4
          %s1944 = int_to_ptr.vmem [resolvable:$true] %s1943
          %1949 = dma.vmem_to_hbm [thread:$0]  %s1944, 2048, %s1942, %s1911, 128, 128, 8
        $region90: #{_sae_forward.1} parent=73 // pred_fallthru
          _
        // Predicated region
        $region91: #{_sae_forward.1} parent=73 // pred_check
          %p1950 = pneg %p210
        $region92: #{_sae_forward.1} parent=73 // pred_check_branch
          %1952 = sbr.rel (%p1950) target = $region94
        $region93: #{_sae_forward.1} parent=73 // pred_region
          %s1953 = smul.u32 16, %s31
          %s1954 = smul.u32 2, %s32
          %s1955 = smul.addr %s1953, 4
          %s1956 = sadd.s32 %s1954, %s1955
          %s1957 = smul.addr %s1956, 4
          %s1958 = scalar_lea.vmem %s6, %s1957
          // Predicated region
          $region95: #{_sae_forward.1} parent=93 // pred_check
            _
          $region96: #{_sae_forward.1} parent=93 // pred_check_branch
            %1960 = sbr.rel (0) target = $region98
          $region97: #{_sae_forward.1} parent=93 // pred_region
            // Predicated region
            $region99: #{_sae_forward.1} parent=97 // pred_check
              _
            $region100: #{_sae_forward.1} parent=97 // pred_check_branch
              %1962 = sbr.rel (0) target = $region102
            $region101: #{_sae_forward.1} parent=97 // pred_region
              // Predicated region
              $region114: #{_sae_forward.1} parent=101 // pred_check
                _
              $region115: #{_sae_forward.1} parent=101 // pred_check_branch
                %2007 = sbr.rel (0) target = $region117
              $region116: #{_sae_forward.1} parent=101 // pred_region
                loop: start=0, step=1, limit=1
                $region118: #{_sae_forward.1} parent=116 // loop_pre_header
                  _
                $region119: #{_sae_forward.1} parent=116 // loop_header
                  %s2009 = sphi 0, %s2013
                  %p2010 = scmp.ge.s32.totalorder %s2009, 1
                  %s2014 = sphi %s1918, %s1918
                  %s2015 = sphi %s1958, %s1958
                $region120: #{_sae_forward.1} parent=116 // loop_header_branch
                  %2012 = sbr.rel (%p2010) target = $region124
                $region121: #{_sae_forward.1} parent=116 // loop_body
                  %v2016 = vld [vmem:[%s2014] sm:$0xff]
                  %2017 = vst [vmem:[%s2015] sm:$0xff] %v2016
                  %v2018 = vld [vmem:[%s2014 + $0x8] sm:$0xff]
                  %2019 = vst [vmem:[%s2015 + $0x10] sm:$0xff] %v2018
                  %v2020 = vld [vmem:[%s2014 + $0x10] sm:$0xff]
                  %2021 = vst [vmem:[%s2015 + $0x20] sm:$0xff] %v2020
                  %v2022 = vld [vmem:[%s2014 + $0x18] sm:$0xff]
                  %2023 = vst [vmem:[%s2015 + $0x30] sm:$0xff] %v2022
                  %v2024 = vld [vmem:[%s2014 + $0x20] sm:$0xff]
                  %2025 = vst [vmem:[%s2015 + $0x40] sm:$0xff] %v2024
                  %v2026 = vld [vmem:[%s2014 + $0x28] sm:$0xff]
                  %2027 = vst [vmem:[%s2015 + $0x50] sm:$0xff] %v2026
                  %v2028 = vld [vmem:[%s2014 + $0x30] sm:$0xff]
                  %2029 = vst [vmem:[%s2015 + $0x60] sm:$0xff] %v2028
                  %v2030 = vld [vmem:[%s2014 + $0x38] sm:$0xff]
                  %2031 = vst [vmem:[%s2015 + $0x70] sm:$0xff] %v2030
                  %v2032 = vld [vmem:[%s2014 + $0x40] sm:$0xff]
                  %2033 = vst [vmem:[%s2015 + $0x80] sm:$0xff] %v2032
                  %v2034 = vld [vmem:[%s2014 + $0x48] sm:$0xff]
                  %2035 = vst [vmem:[%s2015 + $0x90] sm:$0xff] %v2034
                  %v2036 = vld [vmem:[%s2014 + $0x50] sm:$0xff]
                  %2037 = vst [vmem:[%s2015 + $0xa0] sm:$0xff] %v2036
                  %v2038 = vld [vmem:[%s2014 + $0x58] sm:$0xff]
                  %2039 = vst [vmem:[%s2015 + $0xb0] sm:$0xff] %v2038
                  %v2040 = vld [vmem:[%s2014 + $0x60] sm:$0xff]
                  %2041 = vst [vmem:[%s2015 + $0xc0] sm:$0xff] %v2040
                  %v2042 = vld [vmem:[%s2014 + $0x68] sm:$0xff]
                  %2043 = vst [vmem:[%s2015 + $0xd0] sm:$0xff] %v2042
                  %v2044 = vld [vmem:[%s2014 + $0x70] sm:$0xff]
                  %2045 = vst [vmem:[%s2015 + $0xe0] sm:$0xff] %v2044
                  %v2046 = vld [vmem:[%s2014 + $0x78] sm:$0xff]
                  %2047 = vst [vmem:[%s2015 + $0xf0] sm:$0xff] %v2046
                $region122: #{_sae_forward.1} parent=116 // loop_footer
                  %s2013 = sadd.s32 1, %s2009
                $region123: #{_sae_forward.1} parent=116 // loop_footer_branch
                  %2008 = sbr.rel target = $region119
                $region124: #{_sae_forward.1} parent=116 // loop_exit
                  _
              $region117: #{_sae_forward.1} parent=101 // pred_fallthru
                _
              // Predicated region
              $region125: #{_sae_forward.1} parent=101 // pred_check
                _
              $region126: #{_sae_forward.1} parent=101 // pred_check_branch
                %2049 = sbr.rel target = $region128
              $region127: #{_sae_forward.1} parent=101 // pred_region
                _
              $region128: #{_sae_forward.1} parent=101 // pred_fallthru
                _
            $region102: #{_sae_forward.1} parent=97 // pred_fallthru
              _
            // Predicated region
            $region103: #{_sae_forward.1} parent=97 // pred_check
              _
            $region104: #{_sae_forward.1} parent=97 // pred_check_branch
              %1964 = sbr.rel target = $region106
            $region105: #{_sae_forward.1} parent=97 // pred_region
              loop: start=0, step=1, limit=1
              $region107: #{_sae_forward.1} parent=105 // loop_pre_header
                _
              $region108: #{_sae_forward.1} parent=105 // loop_header
                %s1967 = sphi 0, %s1971
                %p1968 = scmp.ge.s32.totalorder %s1967, 1
                %s1972 = sphi %s1918, %s1918
                %s1973 = sphi %s1958, %s1958
              $region109: #{_sae_forward.1} parent=105 // loop_header_branch
                %1970 = sbr.rel (%p1968) target = $region113
              $region110: #{_sae_forward.1} parent=105 // loop_body
                %v1974 = vld [vmem:[%s1972] sm:$0xff]
                %1975 = vst [vmem:[%s1973] sm:$0xff] %v1974
                %v1976 = vld [vmem:[%s1972 + $0x8] sm:$0xff]
                %1977 = vst [vmem:[%s1973 + $0x10] sm:$0xff] %v1976
                %v1978 = vld [vmem:[%s1972 + $0x10] sm:$0xff]
                %1979 = vst [vmem:[%s1973 + $0x20] sm:$0xff] %v1978
                %v1980 = vld [vmem:[%s1972 + $0x18] sm:$0xff]
                %1981 = vst [vmem:[%s1973 + $0x30] sm:$0xff] %v1980
                %v1982 = vld [vmem:[%s1972 + $0x20] sm:$0xff]
                %1983 = vst [vmem:[%s1973 + $0x40] sm:$0xff] %v1982
                %v1984 = vld [vmem:[%s1972 + $0x28] sm:$0xff]
                %1985 = vst [vmem:[%s1973 + $0x50] sm:$0xff] %v1984
                %v1986 = vld [vmem:[%s1972 + $0x30] sm:$0xff]
                %1987 = vst [vmem:[%s1973 + $0x60] sm:$0xff] %v1986
                %v1988 = vld [vmem:[%s1972 + $0x38] sm:$0xff]
                %1989 = vst [vmem:[%s1973 + $0x70] sm:$0xff] %v1988
                %v1990 = vld [vmem:[%s1972 + $0x40] sm:$0xff]
                %1991 = vst [vmem:[%s1973 + $0x80] sm:$0xff] %v1990
                %v1992 = vld [vmem:[%s1972 + $0x48] sm:$0xff]
                %1993 = vst [vmem:[%s1973 + $0x90] sm:$0xff] %v1992
                %v1994 = vld [vmem:[%s1972 + $0x50] sm:$0xff]
                %1995 = vst [vmem:[%s1973 + $0xa0] sm:$0xff] %v1994
                %v1996 = vld [vmem:[%s1972 + $0x58] sm:$0xff]
                %1997 = vst [vmem:[%s1973 + $0xb0] sm:$0xff] %v1996
                %v1998 = vld [vmem:[%s1972 + $0x60] sm:$0xff]
                %1999 = vst [vmem:[%s1973 + $0xc0] sm:$0xff] %v1998
                %v2000 = vld [vmem:[%s1972 + $0x68] sm:$0xff]
                %2001 = vst [vmem:[%s1973 + $0xd0] sm:$0xff] %v2000
                %v2002 = vld [vmem:[%s1972 + $0x70] sm:$0xff]
                %2003 = vst [vmem:[%s1973 + $0xe0] sm:$0xff] %v2002
                %v2004 = vld [vmem:[%s1972 + $0x78] sm:$0xff]
                %2005 = vst [vmem:[%s1973 + $0xf0] sm:$0xff] %v2004
              $region111: #{_sae_forward.1} parent=105 // loop_footer
                %s1971 = sadd.s32 1, %s1967
              $region112: #{_sae_forward.1} parent=105 // loop_footer_branch
                %1966 = sbr.rel target = $region108
              $region113: #{_sae_forward.1} parent=105 // loop_exit
                _
            $region106: #{_sae_forward.1} parent=97 // pred_fallthru
              _
          $region98: #{_sae_forward.1} parent=93 // pred_fallthru
            _
          %2050 = vnop
        $region94: #{_sae_forward.1} parent=73 // pred_fallthru
          _
        // Predicated region
        $region129: #{_sae_forward.1} parent=73 // pred_check
          %p2051 = pneg %p236
        $region130: #{_sae_forward.1} parent=73 // pred_check_branch
          %2053 = sbr.rel (%p2051) target = $region132
        $region131: #{_sae_forward.1} parent=73 // pred_region
          %s2054 = smul.u32 16, %s31
        $region132: #{_sae_forward.1} parent=73 // pred_fallthru
          _
        // Predicated region
        $region133: #{_sae_forward.1} parent=73 // pred_check
          %p2055 = pneg %p262
        $region134: #{_sae_forward.1} parent=73 // pred_check_branch
          %2057 = sbr.rel (%p2055) target = $region136
        $region135: #{_sae_forward.1} parent=73 // pred_region
          %s2058 = smul.u32 16, %s31
        $region136: #{_sae_forward.1} parent=73 // pred_fallthru
          _
        // Predicated region
        $region137: #{_sae_forward.1} parent=73 // pred_check
          %p2059 = pneg %p288
        $region138: #{_sae_forward.1} parent=73 // pred_check_branch
          %2061 = sbr.rel (%p2059) target = $region140
        $region139: #{_sae_forward.1} parent=73 // pred_region
          %s2062 = smul.u32 16, %s31
          %s2064 = ssub.s32 2048, 2048
          %2065 = vsyncadd %s1930, %s2064
          %s2066 = smul.addr %s2062, 128
          %s2067 = scalar_lea.hbm %s9, %s2066
          %s2068 = sshll.u32 %s1933, 4
          %s2069 = int_to_ptr.vmem [resolvable:$true] %s2068
          %2074 = dma.vmem_to_hbm [thread:$0]  %s2069, 2048, %s2067, %s1930, 128, 128, 8
        $region140: #{_sae_forward.1} parent=73 // pred_fallthru
          _
      $region74: #{_sae_forward.1} parent=5 // pred_fallthru
        _
      %p2075 = scmp.le.s32.totalorder 2, %s22
      // Predicated region
      $region141: #{_sae_forward.1} parent=5 // pred_check
        %p2076 = pneg %p2075
      $region142: #{_sae_forward.1} parent=5 // pred_check_branch
        %2078 = sbr.rel (%p2076) target = $region144
      $region143: #{_sae_forward.1} parent=5 // pred_region
        %s2079 = ssub.s32 %s22, 2
        // Predicated region
        $region145: #{_sae_forward.1} parent=143 // pred_check
          %p2080 = pneg %p188
        $region146: #{_sae_forward.1} parent=143 // pred_check_branch
          %2082 = sbr.rel (%p2080) target = $region148
        $region147: #{_sae_forward.1} parent=143 // pred_region
          %s2083 = sand.u32 %s173, 1
          %s2084 = scalar_lea.sflag [#allocation6], %s2083
          %s2085 = sand.u32 %s173, 1
          %s2086 = smul.addr %s2085, 128
          %s2087 = scalar_lea.vmem [#allocation5], %s2086
          %2088 = dma.done %s2084, 2048
        $region148: #{_sae_forward.1} parent=143 // pred_fallthru
          _
        // Predicated region
        $region149: #{_sae_forward.1} parent=143 // pred_check
          %p2089 = pneg %p216
        $region150: #{_sae_forward.1} parent=143 // pred_check_branch
          %2091 = sbr.rel (%p2089) target = $region152
        $region151: #{_sae_forward.1} parent=143 // pred_region
          %s2092 = sand.u32 %s201, 1
          %s2093 = sand.u32 %s201, 1
          %s2094 = smul.addr %s2093, 128
          %s2095 = scalar_lea.vmem [#allocation7], %s2094
        $region152: #{_sae_forward.1} parent=143 // pred_fallthru
          _
        // Predicated region
        $region153: #{_sae_forward.1} parent=143 // pred_check
          %p2096 = pneg %p242
        $region154: #{_sae_forward.1} parent=143 // pred_check_branch
          %2098 = sbr.rel (%p2096) target = $region156
        $region155: #{_sae_forward.1} parent=143 // pred_region
          %s2099 = smul.u32 16, %s33
          %p2100 = scmp.lt.s32.totalorder %s2099, 31
          %s2101 = scalar_select %p2100, %s2099, 31
          %s2102 = smul.addr %s2101, 8
          %s2103 = scalar_lea.vmem %s7, %s2102
        $region156: #{_sae_forward.1} parent=143 // pred_fallthru
          _
        // Predicated region
        $region157: #{_sae_forward.1} parent=143 // pred_check
          %p2104 = pneg %p268
        $region158: #{_sae_forward.1} parent=143 // pred_check_branch
          %2106 = sbr.rel (%p2104) target = $region160
        $region159: #{_sae_forward.1} parent=143 // pred_region
          %s2107 = smul.u32 16, %s33
          %p2108 = scmp.lt.s32.totalorder %s2107, 31
          %s2109 = scalar_select %p2108, %s2107, 31
          %s2110 = smul.addr %s2109, 8
          %s2111 = scalar_lea.vmem %s8, %s2110
        $region160: #{_sae_forward.1} parent=143 // pred_fallthru
          _
        // Predicated region
        $region161: #{_sae_forward.1} parent=143 // pred_check
          %p2112 = pneg %p294
        $region162: #{_sae_forward.1} parent=143 // pred_check_branch
          %2114 = sbr.rel (%p2112) target = $region164
        $region163: #{_sae_forward.1} parent=143 // pred_region
          %s2115 = sand.u32 %s279, 1
          %s2116 = scalar_lea.sflag [#allocation9], %s2115
          %s2117 = sand.u32 %s279, 1
          %s2118 = smul.addr %s2117, 128
          %s2119 = scalar_lea.vmem [#allocation8], %s2118
          %2120 = dma.done %s2116, 2048
        $region164: #{_sae_forward.1} parent=143 // pred_fallthru
          _
      $region144: #{_sae_forward.1} parent=5 // pred_fallthru
        _
    $region6: #{_sae_forward.1} parent=1 // loop_footer
      %s26 = sadd.s32 1, %s22
    $region7: #{_sae_forward.1} parent=1 // loop_footer_branch
      %21 = sbr.rel target = $region3
    $region8: #{_sae_forward.1} parent=1 // loop_exit
      _
    %2121 = vsyncpa [#allocation6], 1
    %s2122 = scalar_lea.sflag [#allocation6], 1
    %2123 = vsyncpa %s2122, 1
    %2124 = vsyncpa [#allocation9], 1
    %s2125 = scalar_lea.sflag [#allocation9], 1
    %2126 = vsyncpa %s2125, 1

</llo_original>
